<compile_context>
chip_gen: v7x
topology: tpu7x:2x2x1
jax: 0.10.0
libtpu: 0.0.40
codegen_flags: <defaults>
</compile_context>

<pallas_src>
import jax
import jax.numpy as jnp
from jax.experimental import pallas as pl
from jax.experimental.pallas import tpu as pltpu

LANE = 128


def _round_up(n, m):
    return ((n + m - 1) // m) * m


def _cdiv(a, b):
    return -(-a // b)


def actor_sac_kernel(s_ref, w_ref, b_ref, o_ref):
    # s_ref: (TB, S)   bf16   state tile at native (unpadded) feature width
    # w_ref: (4, F, F) bf16   stacked zero-padded weights (w4 pre-scaled 1/6)
    # b_ref: (4, F)    f32    stacked zero-padded biases
    # o_ref: (TB, F)   bf16   lane-dense output slab (cols >= action_dim ~ 0)
    x = s_ref[...]
    b = b_ref[...]                      # hoisted: one bias load for all layers
    s_dim = x.shape[1]                  # static python int

    # net_state: Linear -> ReLU -> Linear -> ReLU   (bf16 dots, f32 accumulate)
    h = jnp.dot(x, w_ref[0, :s_dim, :],
                preferred_element_type=jnp.float32) + b[0:1, :]
    h = jnp.maximum(h, 0.0)
    h = jnp.dot(h.astype(jnp.bfloat16), w_ref[1],
                preferred_element_type=jnp.float32) + b[1:2, :]
    h = jnp.maximum(h, 0.0)

    # net_a_avg: Linear -> Hardswish -> Linear
    # (the 1/6 of hardswish is folded into w_ref[3] at prep time)
    z = jnp.dot(h.astype(jnp.bfloat16), w_ref[2],
                preferred_element_type=jnp.float32) + b[2:3, :]
    z = z * jnp.clip(z + 3.0, 0.0, 6.0)
    a = jnp.dot(z.astype(jnp.bfloat16), w_ref[3],
                preferred_element_type=jnp.float32) + b[3:4, :]

    # final .tanh() -> bf16 lane-dense store
    o_ref[...] = jnp.tanh(a).astype(o_ref.dtype)


def prepare_params(params):
    """Pack f32 [in,out]-layout weights into MXU/lane-friendly buffers.

    - every feature dim zero-padded to a common multiple of 128 (lane-dense)
    - weights cast to bf16 (native MXU dtype) and stacked into ONE buffer
    - hardswish's 1/6 folded into w4 (bias b4 left unscaled)
    - biases concatenated into a single f32 buffer
    """
    state_dim = params["w1"].shape[0]
    mid_dim = params["w1"].shape[1]
    action_dim = params["w4"].shape[1]
    F = _round_up(max(state_dim, mid_dim, action_dim), LANE)

    def pad_w(w, scale=1.0):
        out = jnp.zeros((F, F), jnp.float32)
        return out.at[: w.shape[0], : w.shape[1]].set(w * scale)

    def pad_b(b):
        b = b.reshape(-1)
        out = jnp.zeros((F,), jnp.float32)
        return out.at[: b.shape[0]].set(b)

    w_stack = jnp.stack(
        [pad_w(params["w1"]), pad_w(params["w2"]),
         pad_w(params["w3"]), pad_w(params["w4"], scale=1.0 / 6.0)]
    ).astype(jnp.bfloat16)
    b_stack = jnp.stack(
        [pad_b(params["b1"]), pad_b(params["b2"]),
         pad_b(params["b3"]), pad_b(params["b4"])]
    )
    return dict(w=w_stack, b=b_stack, state_dim=state_dim,
                action_dim=action_dim, feat=F)


def _choose_tiling(B, tb_max=512):
    """Pick (tb, nb, B_pad) for the batch grid.

    - nb >= 2 and even: v7x's two TensorCores each get grid steps
      (dimension_semantics=("parallel",)).
    - tiles up to tb_max rows: single-core v5e/v6e amortize the ~0.35 us/step
      pipeline overhead and keep DMA transfers full-rate.
    - smallest 16-aligned tile covering B in nb steps: the last step is not
      mostly padded (dead) rows.  16-alignment keeps bf16 (16,128) sublane
      packing happy; total VMEM stays far under every chip's budget.
    """
    nb = max(2, _cdiv(B, tb_max))
    nb += nb % 2                       # even step count
    tb = _round_up(_cdiv(B, nb), 16)
    b_pad = tb * nb
    return tb, nb, b_pad


def actor_sac_forward(state, packed, *, tb_max=512):
    """state: [B, state_dim] f32.  packed: output of prepare_params."""
    B, state_dim = state.shape
    assert state_dim == packed["state_dim"]
    action_dim = packed["action_dim"]
    F = packed["feat"]

    tb, nb, b_pad = _choose_tiling(B, tb_max)

    # Native-width bf16 state: no feature-padding copy, only (rarely) a small
    # batch pad so the grid divides evenly.
    x = state.astype(jnp.bfloat16)
    if b_pad > B:
        x = jnp.pad(x, ((0, b_pad - B), (0, 0)))

    out = pl.pallas_call(
        actor_sac_kernel,
        out_shape=jax.ShapeDtypeStruct((b_pad, F), jnp.bfloat16),
        grid_spec=pltpu.PrefetchScalarGridSpec(
            num_scalar_prefetch=0,
            grid=(nb,),
            in_specs=[
                # state stream: pipelined over the batch grid, narrow last dim
                # (== full array dim, so the (8,128) rule is satisfied)
                pl.BlockSpec((tb, state_dim), lambda i: (i, 0)),
                # weights / biases: constant index_map -> DMA'd once and
                # VMEM-resident; single buffer (no double-buffering needed)
                pl.BlockSpec((4, F, F), lambda i: (0, 0, 0),
                             pipeline_mode=pl.Buffered(1)),
                pl.BlockSpec((4, F), lambda i: (0, 0),
                             pipeline_mode=pl.Buffered(1)),
            ],
            out_specs=pl.BlockSpec((tb, F), lambda i: (i, 0)),
        ),
        compiler_params=pltpu.CompilerParams(
            dimension_semantics=("parallel",)),
    )(x, packed["w"], packed["b"])

    # Slice off batch padding and the unused lane columns; tiny cast to f32.
    return out[:B, :action_dim].astype(jnp.float32)


def init_params(key, state_dim, mid_dim, action_dim):
    """Deterministic PyTorch-Linear-style init; weights stored as [in, out]."""
    def linear(key, fan_in, fan_out):
        kw, kb = jax.random.split(key)
        bound = 1.0 / jnp.sqrt(float(fan_in))
        w = jax.random.uniform(kw, (fan_in, fan_out), jnp.float32, -bound, bound)
        b = jax.random.uniform(kb, (1, fan_out), jnp.float32, -bound, bound)
        return w, b

    k1, k2, k3, k4 = jax.random.split(key, 4)
    w1, b1 = linear(k1, state_dim, mid_dim)   # net_state[0]
    w2, b2 = linear(k2, mid_dim, mid_dim)     # net_state[2]
    w3, b3 = linear(k3, mid_dim, mid_dim)     # net_a_avg[0]
    w4, b4 = linear(k4, mid_dim, action_dim)  # net_a_avg[2]
    return dict(w1=w1, b1=b1, w2=w2, b2=b2, w3=w3, b3=b3, w4=w4, b4=b4)


if __name__ == "__main__":
    # Module-consistent small shapes; batch big enough to exercise the batch
    # grid (2 parallel grid steps at tb=256) without being large.
    B, state_dim, mid_dim, action_dim = 512, 16, 32, 4

    key = jax.random.PRNGKey(0)
    k_state, k_params = jax.random.split(key)

    state = jax.random.normal(k_state, (B, state_dim), jnp.float32)
    params = init_params(k_params, state_dim, mid_dim, action_dim)
    packed = prepare_params(params)

    out = actor_sac_forward(state, packed)
    jax.block_until_ready(out)

    # Pure-JAX f32 reference (original, unpadded, unscaled params).
    h = jnp.maximum(state @ params["w1"] + params["b1"], 0.0)
    h = jnp.maximum(h @ params["w2"] + params["b2"], 0.0)
    z = h @ params["w3"] + params["b3"]
    z = z * jnp.clip(z + 3.0, 0.0, 6.0) / 6.0
    ref = jnp.tanh(z @ params["w4"] + params["b4"])

    assert out.shape == (B, action_dim)
    # bf16 matmuls (f32 accumulate) + bf16 output store -> relaxed tolerance
    # vs. the f32 reference.  This rounding is the dominant error source.
    assert jnp.allclose(out, ref, atol=4e-2, rtol=4e-2), (
        float(jnp.max(jnp.abs(out - ref))))

    print("KERNEL_OK")
</pallas_src>

<mosaic_0001>
module attributes {stable_mosaic.version = 11 : i64} {
  func.func @actor_sac_kernel(%arg0: i32, %arg1: memref<256x16xbf16, #tpu.memory_space<vmem>>, %arg2: memref<4x128x128xbf16, #tpu.memory_space<vmem>>, %arg3: memref<4x128xf32, #tpu.memory_space<vmem>>, %arg4: memref<256x128xbf16, #tpu.memory_space<vmem>>) attributes {dimension_semantics = [#tpu.dimension_semantics<parallel>], iteration_bounds = array<i64: 2>, scalar_prefetch = 0 : i64, scratch_operands = 0 : i64, tpu.core_type = #tpu.core_type<tc>, window_params = [{transform_indices = @transform_0, window_bounds = array<i64: 256, 16>}, {pipeline_mode = #tpu.pipeline_mode<synchronous>, transform_indices = @transform_1, window_bounds = array<i64: 4, 128, 128>}, {pipeline_mode = #tpu.pipeline_mode<synchronous>, transform_indices = @transform_2, window_bounds = array<i64: 4, 128>}, {transform_indices = @transform_3, window_bounds = array<i64: 256, 128>}]} {
    %c0 = arith.constant 0 : index
    %c0_0 = arith.constant 0 : index
    %0 = vector.load %arg1[%c0, %c0_0] : memref<256x16xbf16, #tpu.memory_space<vmem>>, vector<256x16xbf16>
    %c0_1 = arith.constant 0 : index
    %c0_2 = arith.constant 0 : index
    %1 = vector.load %arg3[%c0_1, %c0_2] : memref<4x128xf32, #tpu.memory_space<vmem>>, vector<4x128xf32>
    %c0_3 = arith.constant 0 : index
    %c0_4 = arith.constant 0 : index
    %c0_5 = arith.constant 0 : index
    %2 = vector.load %arg2[%c0_3, %c0_4, %c0_5] : memref<4x128x128xbf16, #tpu.memory_space<vmem>>, vector<1x16x128xbf16>
    %3 = vector.shape_cast %2 : vector<1x16x128xbf16> to vector<16x128xbf16>
    %cst = arith.constant dense<0.000000e+00> : vector<256x128xf32>
    %4 = tpu.matmul %0, %3, %cst {dimension_numbers = #tpu.dot_dimension_numbers<[1], [0], [0], [1], [0, 0, 1, 1], [], []>} : vector<256x16xbf16>, vector<16x128xbf16>, vector<256x128xf32> -> vector<256x128xf32>
    %5 = vector.extract_strided_slice %1 {offsets = [0, 0], sizes = [1, 128], strides = [1, 1]} : vector<4x128xf32> to vector<1x128xf32>
    %6 = vector.broadcast %5 : vector<1x128xf32> to vector<256x128xf32>
    %7 = arith.addf %4, %6 : vector<256x128xf32>
    %cst_6 = arith.constant 0.000000e+00 : f32
    %8 = vector.broadcast %cst_6 : f32 to vector<256x128xf32>
    %9 = arith.maximumf %7, %8 : vector<256x128xf32>
    %10 = arith.truncf %9 : vector<256x128xf32> to vector<256x128xbf16>
    %c1 = arith.constant 1 : index
    %c0_7 = arith.constant 0 : index
    %c0_8 = arith.constant 0 : index
    %11 = vector.load %arg2[%c1, %c0_7, %c0_8] : memref<4x128x128xbf16, #tpu.memory_space<vmem>>, vector<1x128x128xbf16>
    %12 = vector.shape_cast %11 : vector<1x128x128xbf16> to vector<128x128xbf16>
    %cst_9 = arith.constant dense<0.000000e+00> : vector<256x128xf32>
    %13 = tpu.matmul %10, %12, %cst_9 {dimension_numbers = #tpu.dot_dimension_numbers<[1], [0], [0], [1], [0, 0, 1, 1], [], []>} : vector<256x128xbf16>, vector<128x128xbf16>, vector<256x128xf32> -> vector<256x128xf32>
    %14 = vector.extract_strided_slice %1 {offsets = [1, 0], sizes = [1, 128], strides = [1, 1]} : vector<4x128xf32> to vector<1x128xf32>
    %15 = vector.broadcast %14 : vector<1x128xf32> to vector<256x128xf32>
    %16 = arith.addf %13, %15 : vector<256x128xf32>
    %cst_10 = arith.constant 0.000000e+00 : f32
    %17 = vector.broadcast %cst_10 : f32 to vector<256x128xf32>
    %18 = arith.maximumf %16, %17 : vector<256x128xf32>
    %19 = arith.truncf %18 : vector<256x128xf32> to vector<256x128xbf16>
    %c2 = arith.constant 2 : index
    %c0_11 = arith.constant 0 : index
    %c0_12 = arith.constant 0 : index
    %20 = vector.load %arg2[%c2, %c0_11, %c0_12] : memref<4x128x128xbf16, #tpu.memory_space<vmem>>, vector<1x128x128xbf16>
    %21 = vector.shape_cast %20 : vector<1x128x128xbf16> to vector<128x128xbf16>
    %cst_13 = arith.constant dense<0.000000e+00> : vector<256x128xf32>
    %22 = tpu.matmul %19, %21, %cst_13 {dimension_numbers = #tpu.dot_dimension_numbers<[1], [0], [0], [1], [0, 0, 1, 1], [], []>} : vector<256x128xbf16>, vector<128x128xbf16>, vector<256x128xf32> -> vector<256x128xf32>
    %23 = vector.extract_strided_slice %1 {offsets = [2, 0], sizes = [1, 128], strides = [1, 1]} : vector<4x128xf32> to vector<1x128xf32>
    %24 = vector.broadcast %23 : vector<1x128xf32> to vector<256x128xf32>
    %25 = arith.addf %22, %24 : vector<256x128xf32>
    %cst_14 = arith.constant 3.000000e+00 : f32
    %26 = vector.broadcast %cst_14 : f32 to vector<256x128xf32>
    %27 = arith.addf %25, %26 : vector<256x128xf32>
    %cst_15 = arith.constant 0.000000e+00 : f32
    %cst_16 = arith.constant 6.000000e+00 : f32
    %28 = vector.broadcast %cst_15 : f32 to vector<256x128xf32>
    %29 = arith.maximumf %28, %27 : vector<256x128xf32>
    %30 = vector.broadcast %cst_16 : f32 to vector<256x128xf32>
    %31 = arith.minimumf %30, %29 : vector<256x128xf32>
    %32 = arith.mulf %25, %31 : vector<256x128xf32>
    %33 = arith.truncf %32 : vector<256x128xf32> to vector<256x128xbf16>
    %c3 = arith.constant 3 : index
    %c0_17 = arith.constant 0 : index
    %c0_18 = arith.constant 0 : index
    %34 = vector.load %arg2[%c3, %c0_17, %c0_18] : memref<4x128x128xbf16, #tpu.memory_space<vmem>>, vector<1x128x128xbf16>
    %35 = vector.shape_cast %34 : vector<1x128x128xbf16> to vector<128x128xbf16>
    %cst_19 = arith.constant dense<0.000000e+00> : vector<256x128xf32>
    %36 = tpu.matmul %33, %35, %cst_19 {dimension_numbers = #tpu.dot_dimension_numbers<[1], [0], [0], [1], [0, 0, 1, 1], [], []>} : vector<256x128xbf16>, vector<128x128xbf16>, vector<256x128xf32> -> vector<256x128xf32>
    %37 = vector.extract_strided_slice %1 {offsets = [3, 0], sizes = [1, 128], strides = [1, 1]} : vector<4x128xf32> to vector<1x128xf32>
    %38 = vector.broadcast %37 : vector<1x128xf32> to vector<256x128xf32>
    %39 = arith.addf %36, %38 : vector<256x128xf32>
    %40 = math.tanh %39 : vector<256x128xf32>
    %41 = arith.truncf %40 : vector<256x128xf32> to vector<256x128xbf16>
    %c0_20 = arith.constant 0 : index
    %c0_21 = arith.constant 0 : index
    %42 = vector.load %arg4[%c0_20, %c0_21] : memref<256x128xbf16, #tpu.memory_space<vmem>>, vector<256x128xbf16>
    tpu.vector_store %arg4[%c0_20, %c0_21], %41 {strides = array<i32>} : memref<256x128xbf16, #tpu.memory_space<vmem>>, vector<256x128xbf16>,
    return
  }
  func.func @transform_0(%arg0: i32) -> (i32, i32) {
    %c0_i32 = arith.constant 0 : i32
    %c0_i32_0 = arith.constant 0 : i32
    return %arg0, %c0_i32 : i32, i32
  }
  func.func @transform_1(%arg0: i32) -> (i32, i32, i32) {
    %c0_i32 = arith.constant 0 : i32
    %c0_i32_0 = arith.constant 0 : i32
    %c0_i32_1 = arith.constant 0 : i32
    %c0_i32_2 = arith.constant 0 : i32
    return %c0_i32, %c0_i32_0, %c0_i32_1 : i32, i32, i32
  }
  func.func @transform_2(%arg0: i32) -> (i32, i32) {
    %c0_i32 = arith.constant 0 : i32
    %c0_i32_0 = arith.constant 0 : i32
    %c0_i32_1 = arith.constant 0 : i32
    return %c0_i32, %c0_i32_0 : i32, i32
  }
  func.func @transform_3(%arg0: i32) -> (i32, i32) {
    %c0_i32 = arith.constant 0 : i32
    %c0_i32_0 = arith.constant 0 : i32
    return %arg0, %c0_i32 : i32, i32
  }
}

</mosaic_0001>

<llo_original>
// kernel: tpu_custom_call.1
$region0: #{tpu_custom_call.1}
  #allocation0 [shape = 'u32[]', space=smem, size = 0x4, offset = 0x4, fixed_abs, tag = 'smem constant byte address 0x4 - core index']
  #allocation1 [shape = 'u32[144,128]{1,0:T(1,128)}', space=vmem, size = 0x12000, scoped, tag = 'internal scratch']
  %s0 = inlined_call_operand.vmem [shape: bf16[512,16], index: 0, kind: input, shape index: {}]
  %s1 = inlined_call_operand.vmem [shape: bf16[4,128,128], index: 1, kind: input, shape index: {}]
  %s2 = inlined_call_operand.vmem [shape: f32[4,128], index: 2, kind: input, shape index: {}]
  %s3 = inlined_call_operand.hbm [shape: bf16[512,128], index: 3, kind: output, shape index: {}]
  %s4 = sld [smem:[#allocation0]]
  $region45: #{tpu_custom_call.1} parent=0
    _
  %s6 = ssub.s32 1, %s4
  %s7 = scalar_select 0, %s6, %s4
  $region1: #{tpu_custom_call.1} parent=0
    #allocation2 [shape = 'u8[131072]{0}', space=vmem, size = 0x20000, scoped, tag = 'output window, operand 0']
    #allocation3 [shape = 's32[2]{0}', space=sflag, size = 0x8, scoped, tag = 'scoped memory for tpu_custom_call.1']
    %8 = vsyncpa [#allocation3], 0
    %s9 = scalar_lea.sflag [#allocation3], 1
    %10 = vsyncpa %s9, 0
    loop: start=0, step=1, limit=4
    $region2: #{tpu_custom_call.1} parent=1 // loop_pre_header
      _
    $region3: #{tpu_custom_call.1} parent=1 // loop_header
      %s12 = sphi 0, %s16
      %p13 = scmp.ge.s32.totalorder %s12, 4
      %s22 = sphi 0, %s24
      %s25 = sphi 0, %s22
      %s26 = sphi 0, %s25
      %s42 = sphi 0, %s26
      %s46 = sphi 0, %s46
      %s48 = sphi 0, %s46
      %s49 = sphi 0, %s48
      %s63 = sphi 0, %s49
      %s67 = sphi 0, %s67
      %s69 = sphi 0, %s67
      %s70 = sphi 0, %s69
      %s84 = sphi 0, %s70
      %s90 = sphi 0, %s92
      %s93 = sphi 0, %s90
      %s94 = sphi 0, %s93
      %s110 = sphi 0, %s94
    $region4: #{tpu_custom_call.1} parent=1 // loop_header_branch
      %15 = sbr.rel (%p13) target = $region8
    $region5: #{tpu_custom_call.1} parent=1 // loop_body
      %s17 = ssub.s32 %s12, 1
      %s18 = ssub.s32 %s12, 2
      %s19 = sadd.s32 %s12, 1
      %s20 = ssub.s32 %s12, %s19
      %p21 = scmp.eq.s32.totalorder %s20, 0
      %s23 = sadd.s32 %s22, 1
      %s24 = scalar_select %p21, %s22, %s23
      %p27 = pneg %p21
      %p28 = scmp.eq.s32.totalorder %s12, 1
      %p29 = por %p27, %p28
      %p30 = scmp.ne.s32.totalorder %s22, %s25
      %p31 = scmp.eq.s32.totalorder %s12, 0
      %p32 = por %p30, %p31
      %p33 = scmp.ne.s32.totalorder %s22, %s25
      %p34 = scmp.eq.s32.totalorder %s17, 1
      %p35 = por %p33, %p34
      %p36 = scmp.ne.s32.totalorder %s25, %s26
      %p37 = scmp.eq.s32.totalorder %s17, 0
      %p38 = por %p36, %p37
      %p39 = scmp.ne.s32.totalorder %s25, %s26
      %p40 = scmp.eq.s32.totalorder %s18, 1
      %p41 = por %p39, %p40
      %p43 = scmp.ne.s32.totalorder %s26, %s42
      %p44 = scmp.eq.s32.totalorder %s18, 0
      %p45 = por %p43, %p44
      %s47 = sadd.s32 %s46, 1
      %p50 = scmp.eq.s32.totalorder %s12, 1
      %p51 = scmp.ne.s32.totalorder %s46, %s48
      %p52 = scmp.eq.s32.totalorder %s12, 0
      %p53 = por %p51, %p52
      %p54 = scmp.ne.s32.totalorder %s46, %s48
      %p55 = scmp.eq.s32.totalorder %s17, 1
      %p56 = por %p54, %p55
      %p57 = scmp.ne.s32.totalorder %s48, %s49
      %p58 = scmp.eq.s32.totalorder %s17, 0
      %p59 = por %p57, %p58
      %p60 = scmp.ne.s32.totalorder %s48, %s49
      %p61 = scmp.eq.s32.totalorder %s18, 1
      %p62 = por %p60, %p61
      %p64 = scmp.ne.s32.totalorder %s49, %s63
      %p65 = scmp.eq.s32.totalorder %s18, 0
      %p66 = por %p64, %p65
      %s68 = sadd.s32 %s67, 1
      %p71 = scmp.eq.s32.totalorder %s12, 1
      %p72 = scmp.ne.s32.totalorder %s67, %s69
      %p73 = scmp.eq.s32.totalorder %s12, 0
      %p74 = por %p72, %p73
      %p75 = scmp.ne.s32.totalorder %s67, %s69
      %p76 = scmp.eq.s32.totalorder %s17, 1
      %p77 = por %p75, %p76
      %p78 = scmp.ne.s32.totalorder %s69, %s70
      %p79 = scmp.eq.s32.totalorder %s17, 0
      %p80 = por %p78, %p79
      %p81 = scmp.ne.s32.totalorder %s69, %s70
      %p82 = scmp.eq.s32.totalorder %s18, 1
      %p83 = por %p81, %p82
      %p85 = scmp.ne.s32.totalorder %s70, %s84
      %p86 = scmp.eq.s32.totalorder %s18, 0
      %p87 = por %p85, %p86
      %s88 = ssub.s32 %s12, %s19
      %p89 = scmp.eq.s32.totalorder %s88, 0
      %s91 = sadd.s32 %s90, 1
      %s92 = scalar_select %p89, %s90, %s91
      %p95 = pneg %p89
      %p96 = scmp.eq.s32.totalorder %s12, 1
      %p97 = por %p95, %p96
      %p98 = scmp.ne.s32.totalorder %s90, %s93
      %p99 = scmp.eq.s32.totalorder %s12, 0
      %p100 = por %p98, %p99
      %p101 = scmp.ne.s32.totalorder %s90, %s93
      %p102 = scmp.eq.s32.totalorder %s17, 1
      %p103 = por %p101, %p102
      %p104 = scmp.ne.s32.totalorder %s93, %s94
      %p105 = scmp.eq.s32.totalorder %s17, 0
      %p106 = por %p104, %p105
      %p107 = scmp.ne.s32.totalorder %s93, %s94
      %p108 = scmp.eq.s32.totalorder %s18, 1
      %p109 = por %p107, %p108
      %p111 = scmp.ne.s32.totalorder %s94, %s110
      %p112 = scmp.eq.s32.totalorder %s18, 0
      %p113 = por %p111, %p112
      %p114 = scmp.le.s32.totalorder 1, %s12
      %p115 = scmp.lt.s32.totalorder %s12, 3
      %p116 = pnand %p114, %p115
      %p117 = pneg %p116
      // Predicated region
      $region9: #{tpu_custom_call.1} parent=5 // pred_check
        _
      $region10: #{tpu_custom_call.1} parent=5 // pred_check_branch
        %119 = sbr.rel (%p116) target = $region12
      $region11: #{tpu_custom_call.1} parent=5 // pred_region
        %s120 = ssub.s32 %s12, 1
        // Predicated region
        $region13: #{tpu_custom_call.1} parent=11 // pred_check
          %p121 = pneg %p59
        $region14: #{tpu_custom_call.1} parent=11 // pred_check_branch
          %123 = sbr.rel (%p121) target = $region16
        $region15: #{tpu_custom_call.1} parent=11 // pred_region
          _
        $region16: #{tpu_custom_call.1} parent=11 // pred_fallthru
          _
        // Predicated region
        $region17: #{tpu_custom_call.1} parent=11 // pred_check
          %p124 = pneg %p80
        $region18: #{tpu_custom_call.1} parent=11 // pred_check_branch
          %126 = sbr.rel (%p124) target = $region20
        $region19: #{tpu_custom_call.1} parent=11 // pred_region
          _
        $region20: #{tpu_custom_call.1} parent=11 // pred_fallthru
          _
      $region12: #{tpu_custom_call.1} parent=5 // pred_fallthru
        _
      %p127 = scmp.lt.s32.totalorder %s12, 2
      // Predicated region
      $region21: #{tpu_custom_call.1} parent=5 // pred_check
        %p128 = pneg %p127
      $region22: #{tpu_custom_call.1} parent=5 // pred_check_branch
        %130 = sbr.rel (%p128) target = $region24
      $region23: #{tpu_custom_call.1} parent=5 // pred_region
        // Predicated region
        $region25: #{tpu_custom_call.1} parent=23 // pred_check
          %p131 = pneg %p32
        $region26: #{tpu_custom_call.1} parent=23 // pred_check_branch
          %133 = sbr.rel (%p131) target = $region28
        $region27: #{tpu_custom_call.1} parent=23 // pred_region
          %s134 = smul.u32 32, %s12
          %p135 = scmp.lt.s32.totalorder %s134, 63
          %s136 = scalar_select %p135, %s134, 63
          %s137 = smul.addr %s136, 4
          %s138 = scalar_lea.vmem %s0, %s137
          %s139 = smul.u32 32, %s12
        $region28: #{tpu_custom_call.1} parent=23 // pred_fallthru
          _
      $region24: #{tpu_custom_call.1} parent=5 // pred_fallthru
        _
      %p140 = scmp.le.s32.totalorder 1, %s12
      %p141 = scmp.lt.s32.totalorder %s12, 3
      %p142 = pnand %p140, %p141
      %p143 = pneg %p142
      // Predicated region
      $region29: #{tpu_custom_call.1} parent=5 // pred_check
        _
      $region30: #{tpu_custom_call.1} parent=5 // pred_check_branch
        %145 = sbr.rel (%p142) target = $region32
      $region31: #{tpu_custom_call.1} parent=5 // pred_region
        %s146 = ssub.s32 %s12, 1
        %s147 = smul.u32 32, %s17
        %p148 = scmp.lt.s32.totalorder %s147, 63
        %s149 = scalar_select %p148, %s147, 63
        %s150 = smul.addr %s149, 4
        %s151 = scalar_lea.vmem %s0, %s150
        %p152 = pneg %p38
        %p153 = pneg %p35
        %p154 = pneg %p59
        %p155 = pneg %p56
        %p156 = pneg %p80
        %p157 = pneg %p77
        %p158 = pneg %p106
        %p159 = pneg %p103
        %s160 = sand.u32 %s93, 1
        %s161 = scalar_lea.sflag [#allocation3], %s160
        %s162 = sand.u32 %s93, 1
        %s163 = smul.addr %s162, 128
        %s164 = scalar_lea.vmem [#allocation2], %s163
        %s165 = smul.u32 32, %s17
        %p166 = scmp.lt.s32.totalorder %s165, 63
        %s167 = scalar_select %p166, %s165, 63
        %s168 = smul.addr %s167, 4
        %s169 = scalar_lea.vmem %s0, %s168
        %s170 = smul.u32 32, %s17
        %s171 = smul.u32 32, %s17
        %v173 = vld [vmem:[%s169] sm:$0xf]
        %v174 = vld [vmem:[%s169 + $0x4] sm:$0xf]
        %v175 = vld [vmem:[%s169 + $0x8] sm:$0xf]
        %v176 = vld [vmem:[%s169 + $0xc] sm:$0xf]
        %v177 = vld [vmem:[%s169 + $0x10] sm:$0xf]
        %v178 = vld [vmem:[%s169 + $0x14] sm:$0xf]
        %v179 = vld [vmem:[%s169 + $0x18] sm:$0xf]
        %v180 = vld [vmem:[%s169 + $0x1c] sm:$0xf]
        %v181 = vld [vmem:[%s169 + $0x20] sm:$0xf]
        %v182 = vld [vmem:[%s169 + $0x24] sm:$0xf]
        %v183 = vld [vmem:[%s169 + $0x28] sm:$0xf]
        %v184 = vld [vmem:[%s169 + $0x2c] sm:$0xf]
        %v185 = vld [vmem:[%s169 + $0x30] sm:$0xf]
        %v186 = vld [vmem:[%s169 + $0x34] sm:$0xf]
        %v187 = vld [vmem:[%s169 + $0x38] sm:$0xf]
        %v188 = vld [vmem:[%s169 + $0x3c] sm:$0xf]
        %v189 = vld [vmem:[%s169 + $0x40] sm:$0xf]
        %v190 = vld [vmem:[%s169 + $0x44] sm:$0xf]
        %v191 = vld [vmem:[%s169 + $0x48] sm:$0xf]
        %v192 = vld [vmem:[%s169 + $0x4c] sm:$0xf]
        %v193 = vld [vmem:[%s169 + $0x50] sm:$0xf]
        %v194 = vld [vmem:[%s169 + $0x54] sm:$0xf]
        %v195 = vld [vmem:[%s169 + $0x58] sm:$0xf]
        %v196 = vld [vmem:[%s169 + $0x5c] sm:$0xf]
        %v197 = vld [vmem:[%s169 + $0x60] sm:$0xf]
        %v198 = vld [vmem:[%s169 + $0x64] sm:$0xf]
        %v199 = vld [vmem:[%s169 + $0x68] sm:$0xf]
        %v200 = vld [vmem:[%s169 + $0x6c] sm:$0xf]
        %v201 = vld [vmem:[%s169 + $0x70] sm:$0xf]
        %v202 = vld [vmem:[%s169 + $0x74] sm:$0xf]
        %v203 = vld [vmem:[%s169 + $0x78] sm:$0xf]
        %v204 = vld [vmem:[%s169 + $0x7c] sm:$0xf]
        %v205 = vld [vmem:[%s2] sm:$0xf]
        %v206 = vld [vmem:[%s1] sm:$0xf]
        %v207 = vld [vmem:[%s1 + $0x4] sm:$0xf]
        %v208 = vlaneseq
        %v209 = vshrl.u32 %v208, 7
        %v210 = vsub.s32 0, %v209
        %v211 = vrot.slane %v205, %v210
        %v244 = vunpack.c.l.b16 %v173
        %v245 = vunpack.c.l.b16 %v174
        %v246 = vunpack.c.l.b16 %v175
        %v247 = vunpack.c.l.b16 %v176
        %v248 = vunpack.c.l.b16 %v177
        %v249 = vunpack.c.l.b16 %v178
        %v250 = vunpack.c.l.b16 %v179
        %v251 = vunpack.c.l.b16 %v180
        %v252 = vunpack.c.l.b16 %v181
        %v253 = vunpack.c.l.b16 %v182
        %v254 = vunpack.c.l.b16 %v183
        %v255 = vunpack.c.l.b16 %v184
        %v256 = vunpack.c.l.b16 %v185
        %v257 = vunpack.c.l.b16 %v186
        %v258 = vunpack.c.l.b16 %v187
        %v259 = vunpack.c.l.b16 %v188
        %v260 = vunpack.c.l.b16 %v189
        %v261 = vunpack.c.l.b16 %v190
        %v262 = vunpack.c.l.b16 %v191
        %v263 = vunpack.c.l.b16 %v192
        %v264 = vunpack.c.l.b16 %v193
        %v265 = vunpack.c.l.b16 %v194
        %v266 = vunpack.c.l.b16 %v195
        %v267 = vunpack.c.l.b16 %v196
        %v268 = vunpack.c.l.b16 %v197
        %v269 = vunpack.c.l.b16 %v198
        %v270 = vunpack.c.l.b16 %v199
        %v271 = vunpack.c.l.b16 %v200
        %v272 = vunpack.c.l.b16 %v201
        %v273 = vunpack.c.l.b16 %v202
        %v274 = vunpack.c.l.b16 %v203
        %v275 = vunpack.c.l.b16 %v204
        %v276 = vpack.c.b16 %v245, %v244
        %v277 = vpack.c.b16 %v247, %v246
        %v278 = vpack.c.b16 %v249, %v248
        %v279 = vpack.c.b16 %v251, %v250
        %v280 = vpack.c.b16 %v253, %v252
        %v281 = vpack.c.b16 %v255, %v254
        %v282 = vpack.c.b16 %v257, %v256
        %v283 = vpack.c.b16 %v259, %v258
        %v284 = vpack.c.b16 %v261, %v260
        %v285 = vpack.c.b16 %v263, %v262
        %v286 = vpack.c.b16 %v265, %v264
        %v287 = vpack.c.b16 %v267, %v266
        %v288 = vpack.c.b16 %v269, %v268
        %v289 = vpack.c.b16 %v271, %v270
        %v290 = vpack.c.b16 %v273, %v272
        %v291 = vpack.c.b16 %v275, %v274
        %v294 = vunpack.c.l.b16 %v206
        %v295 = vunpack.c.l.b16 %v207
        %v296 = vpack.c.b16 %v295, %v294
        %vm298 = vcmask 130048
        %v300 = vsel %vm298, %v276, 0
        %v303 = vsel %vm298, %v277, 0
        %v306 = vsel %vm298, %v278, 0
        %v309 = vsel %vm298, %v279, 0
        %v312 = vsel %vm298, %v280, 0
        %v315 = vsel %vm298, %v281, 0
        %v318 = vsel %vm298, %v282, 0
        %v321 = vsel %vm298, %v283, 0
        %v324 = vsel %vm298, %v284, 0
        %v327 = vsel %vm298, %v285, 0
        %v330 = vsel %vm298, %v286, 0
        %v333 = vsel %vm298, %v287, 0
        %v336 = vsel %vm298, %v288, 0
        %v339 = vsel %vm298, %v289, 0
        %v342 = vsel %vm298, %v290, 0
        %v345 = vsel %vm298, %v291, 0
        %347 = vmatprep.subr.bf16.mxu0 0
        %348 = vmatpush1.bf16.msra.mxu0 %v296
        %349 = vmatprep.subr.bf16.mxu0 0
        %350 = vmatpush1.bf16.msra.mxu0 0
        %351 = vmatprep.subr.bf16.mxu0 0
        %352 = vmatpush1.bf16.msra.mxu0 0
        %353 = vmatprep.subr.bf16.mxu0 0
        %354 = vmatpush1.bf16.msra.mxu0 0
        %355 = vmatprep.subr.bf16.mxu0 0
        %356 = vmatpush1.bf16.msra.mxu0 0
        %357 = vmatprep.subr.bf16.mxu0 0
        %358 = vmatpush1.bf16.msra.mxu0 0
        %359 = vmatprep.subr.bf16.mxu0 0
        %360 = vmatpush1.bf16.msra.mxu0 0
        %361 = vmatprep.subr.bf16.mxu0 0
        %362 = vmatpush1.bf16.msra.mxu0 0
        %363 = vmatprep.subr.bf16.mxu0 0
        %364 = vmatpush1.bf16.msra.mxu0 0
        %365 = vmatprep.subr.bf16.mxu0 0
        %366 = vmatpush1.bf16.msra.mxu0 0
        %367 = vmatprep.subr.bf16.mxu0 0
        %368 = vmatpush1.bf16.msra.mxu0 0
        %369 = vmatprep.subr.bf16.mxu0 0
        %370 = vmatpush1.bf16.msra.mxu0 0
        %371 = vmatprep.subr.bf16.mxu0 0
        %372 = vmatpush1.bf16.msra.mxu0 0
        %373 = vmatprep.subr.bf16.mxu0 0
        %374 = vmatpush1.bf16.msra.mxu0 0
        %375 = vmatprep.subr.bf16.mxu0 0
        %376 = vmatpush1.bf16.msra.mxu0 0
        %377 = vmatprep.subr.bf16.mxu0 0
        %378 = vmatpush1.bf16.msra.mxu0 0
        %379 = vmatprep.mubr.bf16.mxu0 0
        %380 = vmatmul.mubr.bf16.gmra.mrb[0].mxu0 %v300
        %v381 = vpop.f32.mrb[0].mxu0
        %v382 = vadd.f32 %v211, %v381
        %v383 = vpop.f32.mrb[0].mxu0
        %v384 = vpop.f32.mrb[0].mxu0
        %v385 = vadd.f32 %v211, %v384
        %v386 = vpop.f32.mrb[0].mxu0
        %387 = vmatprep.mubr.bf16.mxu0 0
        %388 = vmatmul.mubr.bf16.gmra.mrb[0].mxu0 %v303
        %v389 = vpop.f32.mrb[0].mxu0
        %v390 = vadd.f32 %v211, %v389
        %v391 = vpop.f32.mrb[0].mxu0
        %v392 = vpop.f32.mrb[0].mxu0
        %v393 = vadd.f32 %v211, %v392
        %v394 = vpop.f32.mrb[0].mxu0
        %395 = vmatprep.mubr.bf16.mxu0 0
        %396 = vmatmul.mubr.bf16.gmra.mrb[0].mxu0 %v306
        %v397 = vpop.f32.mrb[0].mxu0
        %v398 = vadd.f32 %v211, %v397
        %v399 = vpop.f32.mrb[0].mxu0
        %v400 = vpop.f32.mrb[0].mxu0
        %v401 = vadd.f32 %v211, %v400
        %v402 = vpop.f32.mrb[0].mxu0
        %403 = vmatprep.mubr.bf16.mxu0 0
        %404 = vmatmul.mubr.bf16.gmra.mrb[0].mxu0 %v309
        %v405 = vpop.f32.mrb[0].mxu0
        %v406 = vadd.f32 %v211, %v405
        %v407 = vpop.f32.mrb[0].mxu0
        %v408 = vpop.f32.mrb[0].mxu0
        %v409 = vadd.f32 %v211, %v408
        %v410 = vpop.f32.mrb[0].mxu0
        %411 = vmatprep.mubr.bf16.mxu0 0
        %412 = vmatmul.mubr.bf16.gmra.mrb[0].mxu0 %v312
        %v413 = vpop.f32.mrb[0].mxu0
        %v414 = vadd.f32 %v211, %v413
        %v415 = vpop.f32.mrb[0].mxu0
        %v416 = vpop.f32.mrb[0].mxu0
        %v417 = vadd.f32 %v211, %v416
        %v418 = vpop.f32.mrb[0].mxu0
        %419 = vmatprep.mubr.bf16.mxu0 0
        %420 = vmatmul.mubr.bf16.gmra.mrb[0].mxu0 %v315
        %v421 = vpop.f32.mrb[0].mxu0
        %v422 = vadd.f32 %v211, %v421
        %v423 = vpop.f32.mrb[0].mxu0
        %v424 = vpop.f32.mrb[0].mxu0
        %v425 = vadd.f32 %v211, %v424
        %v426 = vpop.f32.mrb[0].mxu0
        %427 = vmatprep.mubr.bf16.mxu0 0
        %428 = vmatmul.mubr.bf16.gmra.mrb[0].mxu0 %v318
        %v429 = vpop.f32.mrb[0].mxu0
        %v430 = vadd.f32 %v211, %v429
        %v431 = vpop.f32.mrb[0].mxu0
        %v432 = vpop.f32.mrb[0].mxu0
        %v433 = vadd.f32 %v211, %v432
        %v434 = vpop.f32.mrb[0].mxu0
        %435 = vmatprep.mubr.bf16.mxu0 0
        %436 = vmatmul.mubr.bf16.gmra.mrb[0].mxu0 %v321
        %v437 = vpop.f32.mrb[0].mxu0
        %v438 = vadd.f32 %v211, %v437
        %v439 = vpop.f32.mrb[0].mxu0
        %v440 = vpop.f32.mrb[0].mxu0
        %v441 = vadd.f32 %v211, %v440
        %v442 = vpop.f32.mrb[0].mxu0
        %443 = vmatprep.mubr.bf16.mxu0 0
        %444 = vmatmul.mubr.bf16.gmra.mrb[0].mxu0 %v324
        %v445 = vpop.f32.mrb[0].mxu0
        %v446 = vadd.f32 %v211, %v445
        %v447 = vpop.f32.mrb[0].mxu0
        %v448 = vpop.f32.mrb[0].mxu0
        %v449 = vadd.f32 %v211, %v448
        %v450 = vpop.f32.mrb[0].mxu0
        %451 = vmatprep.mubr.bf16.mxu0 0
        %452 = vmatmul.mubr.bf16.gmra.mrb[0].mxu0 %v327
        %v453 = vpop.f32.mrb[0].mxu0
        %v454 = vadd.f32 %v211, %v453
        %v455 = vpop.f32.mrb[0].mxu0
        %v456 = vpop.f32.mrb[0].mxu0
        %v457 = vadd.f32 %v211, %v456
        %v458 = vpop.f32.mrb[0].mxu0
        %459 = vmatprep.mubr.bf16.mxu0 0
        %460 = vmatmul.mubr.bf16.gmra.mrb[0].mxu0 %v330
        %v461 = vpop.f32.mrb[0].mxu0
        %v462 = vadd.f32 %v211, %v461
        %v463 = vpop.f32.mrb[0].mxu0
        %v464 = vpop.f32.mrb[0].mxu0
        %v465 = vadd.f32 %v211, %v464
        %v466 = vpop.f32.mrb[0].mxu0
        %467 = vmatprep.mubr.bf16.mxu0 0
        %468 = vmatmul.mubr.bf16.gmra.mrb[0].mxu0 %v333
        %v469 = vpop.f32.mrb[0].mxu0
        %v470 = vadd.f32 %v211, %v469
        %v471 = vpop.f32.mrb[0].mxu0
        %v472 = vpop.f32.mrb[0].mxu0
        %v473 = vadd.f32 %v211, %v472
        %v474 = vpop.f32.mrb[0].mxu0
        %475 = vmatprep.mubr.bf16.mxu0 0
        %476 = vmatmul.mubr.bf16.gmra.mrb[0].mxu0 %v336
        %v477 = vpop.f32.mrb[0].mxu0
        %v478 = vadd.f32 %v211, %v477
        %v479 = vpop.f32.mrb[0].mxu0
        %v480 = vpop.f32.mrb[0].mxu0
        %v481 = vadd.f32 %v211, %v480
        %v482 = vpop.f32.mrb[0].mxu0
        %483 = vmatprep.mubr.bf16.mxu0 0
        %484 = vmatmul.mubr.bf16.gmra.mrb[0].mxu0 %v339
        %v485 = vpop.f32.mrb[0].mxu0
        %v486 = vadd.f32 %v211, %v485
        %v487 = vpop.f32.mrb[0].mxu0
        %v488 = vpop.f32.mrb[0].mxu0
        %v489 = vadd.f32 %v211, %v488
        %v490 = vpop.f32.mrb[0].mxu0
        %491 = vmatprep.mubr.bf16.mxu0 0
        %492 = vmatmul.mubr.bf16.gmra.mrb[0].mxu0 %v342
        %v493 = vpop.f32.mrb[0].mxu0
        %v494 = vadd.f32 %v211, %v493
        %v495 = vpop.f32.mrb[0].mxu0
        %v496 = vpop.f32.mrb[0].mxu0
        %v497 = vadd.f32 %v211, %v496
        %v498 = vpop.f32.mrb[0].mxu0
        %499 = vmatprep.mubr.bf16.mxu0 0
        %500 = vmatmul.mubr.bf16.gmra.mrb[0].mxu0 %v345
        %v501 = vpop.f32.mrb[0].mxu0
        %v502 = vadd.f32 %v211, %v501
        %v503 = vpop.f32.mrb[0].mxu0
        %v504 = vpop.f32.mrb[0].mxu0
        %v505 = vadd.f32 %v211, %v504
        %v506 = vpop.f32.mrb[0].mxu0
        %507 = vdwg.mxu0
        %v508 = vmax.f32 %v382, 0.0
        %v509 = vmax.f32 %v385, 0.0
        %v510 = vmax.f32 %v390, 0.0
        %v511 = vmax.f32 %v393, 0.0
        %v512 = vmax.f32 %v398, 0.0
        %v513 = vmax.f32 %v401, 0.0
        %v514 = vmax.f32 %v406, 0.0
        %v515 = vmax.f32 %v409, 0.0
        %v516 = vmax.f32 %v414, 0.0
        %v517 = vmax.f32 %v417, 0.0
        %v518 = vmax.f32 %v422, 0.0
        %v519 = vmax.f32 %v425, 0.0
        %v520 = vmax.f32 %v430, 0.0
        %v521 = vmax.f32 %v433, 0.0
        %v522 = vmax.f32 %v438, 0.0
        %v523 = vmax.f32 %v441, 0.0
        %v524 = vmax.f32 %v446, 0.0
        %v525 = vmax.f32 %v449, 0.0
        %v526 = vmax.f32 %v454, 0.0
        %v527 = vmax.f32 %v457, 0.0
        %v528 = vmax.f32 %v462, 0.0
        %v529 = vmax.f32 %v465, 0.0
        %v530 = vmax.f32 %v470, 0.0
        %v531 = vmax.f32 %v473, 0.0
        %v532 = vmax.f32 %v478, 0.0
        %v533 = vmax.f32 %v481, 0.0
        %v534 = vmax.f32 %v486, 0.0
        %v535 = vmax.f32 %v489, 0.0
        %v536 = vmax.f32 %v494, 0.0
        %v537 = vmax.f32 %v497, 0.0
        %v538 = vmax.f32 %v502, 0.0
        %v539 = vmax.f32 %v505, 0.0
        %v540 = vpack.c.bf16 %v509, %v508
        %v541 = vpack.c.bf16 %v511, %v510
        %v542 = vpack.c.bf16 %v513, %v512
        %v543 = vpack.c.bf16 %v515, %v514
        %v544 = vpack.c.bf16 %v517, %v516
        %v545 = vpack.c.bf16 %v519, %v518
        %v546 = vpack.c.bf16 %v521, %v520
        %v547 = vpack.c.bf16 %v523, %v522
        %v548 = vpack.c.bf16 %v525, %v524
        %v549 = vpack.c.bf16 %v527, %v526
        %v550 = vpack.c.bf16 %v529, %v528
        %v551 = vpack.c.bf16 %v531, %v530
        %v552 = vpack.c.bf16 %v533, %v532
        %v553 = vpack.c.bf16 %v535, %v534
        %v554 = vpack.c.bf16 %v537, %v536
        %v555 = vpack.c.bf16 %v539, %v538
        %s556 = scalar_lea.vmem %s1, 64
        %v557 = vld [vmem:[%s556] sm:$0xf]
        %v558 = vld [vmem:[%s556 + $0x4] sm:$0xf]
        %v559 = vld [vmem:[%s556 + $0x8] sm:$0xf]
        %v560 = vld [vmem:[%s556 + $0xc] sm:$0xf]
        %v561 = vld [vmem:[%s556 + $0x10] sm:$0xf]
        %v562 = vld [vmem:[%s556 + $0x14] sm:$0xf]
        %v563 = vld [vmem:[%s556 + $0x18] sm:$0xf]
        %v564 = vld [vmem:[%s556 + $0x1c] sm:$0xf]
        %v565 = vld [vmem:[%s556 + $0x20] sm:$0xf]
        %v566 = vld [vmem:[%s556 + $0x24] sm:$0xf]
        %v567 = vld [vmem:[%s556 + $0x28] sm:$0xf]
        %v568 = vld [vmem:[%s556 + $0x2c] sm:$0xf]
        %v569 = vld [vmem:[%s556 + $0x30] sm:$0xf]
        %v570 = vld [vmem:[%s556 + $0x34] sm:$0xf]
        %v571 = vld [vmem:[%s556 + $0x38] sm:$0xf]
        %v572 = vld [vmem:[%s556 + $0x3c] sm:$0xf]
        %v573 = vlaneseq
        %v574 = vshrl.u32 %v573, 7
        %v575 = vsub.s32 1, %v574
        %v576 = vrot.slane %v205, %v575
        %v593 = vunpack.c.l.b16 %v557
        %v594 = vunpack.c.l.b16 %v558
        %v595 = vunpack.c.l.b16 %v559
        %v596 = vunpack.c.l.b16 %v560
        %v597 = vunpack.c.l.b16 %v561
        %v598 = vunpack.c.l.b16 %v562
        %v599 = vunpack.c.l.b16 %v563
        %v600 = vunpack.c.l.b16 %v564
        %v601 = vunpack.c.l.b16 %v565
        %v602 = vunpack.c.l.b16 %v566
        %v603 = vunpack.c.l.b16 %v567
        %v604 = vunpack.c.l.b16 %v568
        %v605 = vunpack.c.l.b16 %v569
        %v606 = vunpack.c.l.b16 %v570
        %v607 = vunpack.c.l.b16 %v571
        %v608 = vunpack.c.l.b16 %v572
        %v609 = vpack.c.b16 %v594, %v593
        %v610 = vpack.c.b16 %v596, %v595
        %v611 = vpack.c.b16 %v598, %v597
        %v612 = vpack.c.b16 %v600, %v599
        %v613 = vpack.c.b16 %v602, %v601
        %v614 = vpack.c.b16 %v604, %v603
        %v615 = vpack.c.b16 %v606, %v605
        %v616 = vpack.c.b16 %v608, %v607
        %625 = vmatprep.subr.bf16.mxu0 0
        %626 = vmatpush1.bf16.msra.mxu0 %v609
        %627 = vmatprep.subr.bf16.mxu0 0
        %628 = vmatpush1.bf16.msra.mxu0 %v610
        %629 = vmatprep.subr.bf16.mxu0 0
        %630 = vmatpush1.bf16.msra.mxu0 %v611
        %631 = vmatprep.subr.bf16.mxu0 0
        %632 = vmatpush1.bf16.msra.mxu0 %v612
        %633 = vmatprep.subr.bf16.mxu0 0
        %634 = vmatpush1.bf16.msra.mxu0 %v613
        %635 = vmatprep.subr.bf16.mxu0 0
        %636 = vmatpush1.bf16.msra.mxu0 %v614
        %637 = vmatprep.subr.bf16.mxu0 0
        %638 = vmatpush1.bf16.msra.mxu0 %v615
        %639 = vmatprep.subr.bf16.mxu0 0
        %640 = vmatpush1.bf16.msra.mxu0 %v616
        %641 = vmatprep.subr.bf16.mxu0 0
        %642 = vmatpush1.bf16.msra.mxu0 0
        %643 = vmatprep.subr.bf16.mxu0 0
        %644 = vmatpush1.bf16.msra.mxu0 0
        %645 = vmatprep.subr.bf16.mxu0 0
        %646 = vmatpush1.bf16.msra.mxu0 0
        %647 = vmatprep.subr.bf16.mxu0 0
        %648 = vmatpush1.bf16.msra.mxu0 0
        %649 = vmatprep.subr.bf16.mxu0 0
        %650 = vmatpush1.bf16.msra.mxu0 0
        %651 = vmatprep.subr.bf16.mxu0 0
        %652 = vmatpush1.bf16.msra.mxu0 0
        %653 = vmatprep.subr.bf16.mxu0 0
        %654 = vmatpush1.bf16.msra.mxu0 0
        %655 = vmatprep.subr.bf16.mxu0 0
        %656 = vmatpush1.bf16.msra.mxu0 0
        %657 = vmatprep.mubr.bf16.mxu0 0
        %658 = vmatmul.mubr.bf16.gmra.mrb[0].mxu0 %v540
        %v659 = vpop.f32.mrb[0].mxu0
        %v660 = vadd.f32 %v576, %v659
        %v661 = vpop.f32.mrb[0].mxu0
        %v662 = vpop.f32.mrb[0].mxu0
        %v663 = vadd.f32 %v576, %v662
        %v664 = vpop.f32.mrb[0].mxu0
        %665 = vmatprep.mubr.bf16.mxu0 0
        %666 = vmatmul.mubr.bf16.gmra.mrb[0].mxu0 %v541
        %v667 = vpop.f32.mrb[0].mxu0
        %v668 = vadd.f32 %v576, %v667
        %v669 = vpop.f32.mrb[0].mxu0
        %v670 = vpop.f32.mrb[0].mxu0
        %v671 = vadd.f32 %v576, %v670
        %v672 = vpop.f32.mrb[0].mxu0
        %673 = vmatprep.mubr.bf16.mxu0 0
        %674 = vmatmul.mubr.bf16.gmra.mrb[0].mxu0 %v542
        %v675 = vpop.f32.mrb[0].mxu0
        %v676 = vadd.f32 %v576, %v675
        %v677 = vpop.f32.mrb[0].mxu0
        %v678 = vpop.f32.mrb[0].mxu0
        %v679 = vadd.f32 %v576, %v678
        %v680 = vpop.f32.mrb[0].mxu0
        %681 = vmatprep.mubr.bf16.mxu0 0
        %682 = vmatmul.mubr.bf16.gmra.mrb[0].mxu0 %v543
        %v683 = vpop.f32.mrb[0].mxu0
        %v684 = vadd.f32 %v576, %v683
        %v685 = vpop.f32.mrb[0].mxu0
        %v686 = vpop.f32.mrb[0].mxu0
        %v687 = vadd.f32 %v576, %v686
        %v688 = vpop.f32.mrb[0].mxu0
        %689 = vmatprep.mubr.bf16.mxu0 0
        %690 = vmatmul.mubr.bf16.gmra.mrb[0].mxu0 %v544
        %v691 = vpop.f32.mrb[0].mxu0
        %v692 = vadd.f32 %v576, %v691
        %v693 = vpop.f32.mrb[0].mxu0
        %v694 = vpop.f32.mrb[0].mxu0
        %v695 = vadd.f32 %v576, %v694
        %v696 = vpop.f32.mrb[0].mxu0
        %697 = vmatprep.mubr.bf16.mxu0 0
        %698 = vmatmul.mubr.bf16.gmra.mrb[0].mxu0 %v545
        %v699 = vpop.f32.mrb[0].mxu0
        %v700 = vadd.f32 %v576, %v699
        %v701 = vpop.f32.mrb[0].mxu0
        %v702 = vpop.f32.mrb[0].mxu0
        %v703 = vadd.f32 %v576, %v702
        %v704 = vpop.f32.mrb[0].mxu0
        %705 = vmatprep.mubr.bf16.mxu0 0
        %706 = vmatmul.mubr.bf16.gmra.mrb[0].mxu0 %v546
        %v707 = vpop.f32.mrb[0].mxu0
        %v708 = vadd.f32 %v576, %v707
        %v709 = vpop.f32.mrb[0].mxu0
        %v710 = vpop.f32.mrb[0].mxu0
        %v711 = vadd.f32 %v576, %v710
        %v712 = vpop.f32.mrb[0].mxu0
        %713 = vmatprep.mubr.bf16.mxu0 0
        %714 = vmatmul.mubr.bf16.gmra.mrb[0].mxu0 %v547
        %v715 = vpop.f32.mrb[0].mxu0
        %v716 = vadd.f32 %v576, %v715
        %v717 = vpop.f32.mrb[0].mxu0
        %v718 = vpop.f32.mrb[0].mxu0
        %v719 = vadd.f32 %v576, %v718
        %v720 = vpop.f32.mrb[0].mxu0
        %721 = vmatprep.mubr.bf16.mxu0 0
        %722 = vmatmul.mubr.bf16.gmra.mrb[0].mxu0 %v548
        %v723 = vpop.f32.mrb[0].mxu0
        %v724 = vadd.f32 %v576, %v723
        %v725 = vpop.f32.mrb[0].mxu0
        %v726 = vpop.f32.mrb[0].mxu0
        %v727 = vadd.f32 %v576, %v726
        %v728 = vpop.f32.mrb[0].mxu0
        %729 = vmatprep.mubr.bf16.mxu0 0
        %730 = vmatmul.mubr.bf16.gmra.mrb[0].mxu0 %v549
        %v731 = vpop.f32.mrb[0].mxu0
        %v732 = vadd.f32 %v576, %v731
        %v733 = vpop.f32.mrb[0].mxu0
        %v734 = vpop.f32.mrb[0].mxu0
        %v735 = vadd.f32 %v576, %v734
        %v736 = vpop.f32.mrb[0].mxu0
        %737 = vmatprep.mubr.bf16.mxu0 0
        %738 = vmatmul.mubr.bf16.gmra.mrb[0].mxu0 %v550
        %v739 = vpop.f32.mrb[0].mxu0
        %v740 = vadd.f32 %v576, %v739
        %v741 = vpop.f32.mrb[0].mxu0
        %v742 = vpop.f32.mrb[0].mxu0
        %v743 = vadd.f32 %v576, %v742
        %v744 = vpop.f32.mrb[0].mxu0
        %745 = vmatprep.mubr.bf16.mxu0 0
        %746 = vmatmul.mubr.bf16.gmra.mrb[0].mxu0 %v551
        %v747 = vpop.f32.mrb[0].mxu0
        %v748 = vadd.f32 %v576, %v747
        %v749 = vpop.f32.mrb[0].mxu0
        %v750 = vpop.f32.mrb[0].mxu0
        %v751 = vadd.f32 %v576, %v750
        %v752 = vpop.f32.mrb[0].mxu0
        %753 = vmatprep.mubr.bf16.mxu0 0
        %754 = vmatmul.mubr.bf16.gmra.mrb[0].mxu0 %v552
        %v755 = vpop.f32.mrb[0].mxu0
        %v756 = vadd.f32 %v576, %v755
        %v757 = vpop.f32.mrb[0].mxu0
        %v758 = vpop.f32.mrb[0].mxu0
        %v759 = vadd.f32 %v576, %v758
        %v760 = vpop.f32.mrb[0].mxu0
        %761 = vmatprep.mubr.bf16.mxu0 0
        %762 = vmatmul.mubr.bf16.gmra.mrb[0].mxu0 %v553
        %v763 = vpop.f32.mrb[0].mxu0
        %v764 = vadd.f32 %v576, %v763
        %v765 = vpop.f32.mrb[0].mxu0
        %v766 = vpop.f32.mrb[0].mxu0
        %v767 = vadd.f32 %v576, %v766
        %v768 = vpop.f32.mrb[0].mxu0
        %769 = vmatprep.mubr.bf16.mxu0 0
        %770 = vmatmul.mubr.bf16.gmra.mrb[0].mxu0 %v554
        %v771 = vpop.f32.mrb[0].mxu0
        %v772 = vadd.f32 %v576, %v771
        %v773 = vpop.f32.mrb[0].mxu0
        %v774 = vpop.f32.mrb[0].mxu0
        %v775 = vadd.f32 %v576, %v774
        %v776 = vpop.f32.mrb[0].mxu0
        %777 = vmatprep.mubr.bf16.mxu0 0
        %778 = vmatmul.mubr.bf16.gmra.mrb[0].mxu0 %v555
        %v779 = vpop.f32.mrb[0].mxu0
        %v780 = vadd.f32 %v576, %v779
        %v781 = vpop.f32.mrb[0].mxu0
        %v782 = vpop.f32.mrb[0].mxu0
        %v783 = vadd.f32 %v576, %v782
        %v784 = vpop.f32.mrb[0].mxu0
        %785 = vdwg.mxu0
        %v786 = vmax.f32 %v660, 0.0
        %v787 = vmax.f32 %v663, 0.0
        %v788 = vmax.f32 %v668, 0.0
        %v789 = vmax.f32 %v671, 0.0
        %v790 = vmax.f32 %v676, 0.0
        %v791 = vmax.f32 %v679, 0.0
        %v792 = vmax.f32 %v684, 0.0
        %v793 = vmax.f32 %v687, 0.0
        %v794 = vmax.f32 %v692, 0.0
        %v795 = vmax.f32 %v695, 0.0
        %v796 = vmax.f32 %v700, 0.0
        %v797 = vmax.f32 %v703, 0.0
        %v798 = vmax.f32 %v708, 0.0
        %v799 = vmax.f32 %v711, 0.0
        %v800 = vmax.f32 %v716, 0.0
        %v801 = vmax.f32 %v719, 0.0
        %v802 = vmax.f32 %v724, 0.0
        %v803 = vmax.f32 %v727, 0.0
        %v804 = vmax.f32 %v732, 0.0
        %v805 = vmax.f32 %v735, 0.0
        %v806 = vmax.f32 %v740, 0.0
        %v807 = vmax.f32 %v743, 0.0
        %v808 = vmax.f32 %v748, 0.0
        %v809 = vmax.f32 %v751, 0.0
        %v810 = vmax.f32 %v756, 0.0
        %v811 = vmax.f32 %v759, 0.0
        %v812 = vmax.f32 %v764, 0.0
        %v813 = vmax.f32 %v767, 0.0
        %v814 = vmax.f32 %v772, 0.0
        %v815 = vmax.f32 %v775, 0.0
        %v816 = vmax.f32 %v780, 0.0
        %v817 = vmax.f32 %v783, 0.0
        %v818 = vpack.c.bf16 %v787, %v786
        %v819 = vpack.c.bf16 %v789, %v788
        %v820 = vpack.c.bf16 %v791, %v790
        %v821 = vpack.c.bf16 %v793, %v792
        %v822 = vpack.c.bf16 %v795, %v794
        %v823 = vpack.c.bf16 %v797, %v796
        %v824 = vpack.c.bf16 %v799, %v798
        %v825 = vpack.c.bf16 %v801, %v800
        %v826 = vpack.c.bf16 %v803, %v802
        %v827 = vpack.c.bf16 %v805, %v804
        %v828 = vpack.c.bf16 %v807, %v806
        %v829 = vpack.c.bf16 %v809, %v808
        %v830 = vpack.c.bf16 %v811, %v810
        %v831 = vpack.c.bf16 %v813, %v812
        %v832 = vpack.c.bf16 %v815, %v814
        %v833 = vpack.c.bf16 %v817, %v816
        %s834 = scalar_lea.vmem %s1, 128
        %v835 = vld [vmem:[%s834] sm:$0xf]
        %v836 = vld [vmem:[%s834 + $0x4] sm:$0xf]
        %v837 = vld [vmem:[%s834 + $0x8] sm:$0xf]
        %v838 = vld [vmem:[%s834 + $0xc] sm:$0xf]
        %v839 = vld [vmem:[%s834 + $0x10] sm:$0xf]
        %v840 = vld [vmem:[%s834 + $0x14] sm:$0xf]
        %v841 = vld [vmem:[%s834 + $0x18] sm:$0xf]
        %v842 = vld [vmem:[%s834 + $0x1c] sm:$0xf]
        %v843 = vld [vmem:[%s834 + $0x20] sm:$0xf]
        %v844 = vld [vmem:[%s834 + $0x24] sm:$0xf]
        %v845 = vld [vmem:[%s834 + $0x28] sm:$0xf]
        %v846 = vld [vmem:[%s834 + $0x2c] sm:$0xf]
        %v847 = vld [vmem:[%s834 + $0x30] sm:$0xf]
        %v848 = vld [vmem:[%s834 + $0x34] sm:$0xf]
        %v849 = vld [vmem:[%s834 + $0x38] sm:$0xf]
        %v850 = vld [vmem:[%s834 + $0x3c] sm:$0xf]
        %v851 = vlaneseq
        %v852 = vshrl.u32 %v851, 7
        %v853 = vsub.s32 2, %v852
        %v854 = vrot.slane %v205, %v853
        %v871 = vunpack.c.l.b16 %v835
        %v872 = vunpack.c.l.b16 %v836
        %v873 = vunpack.c.l.b16 %v837
        %v874 = vunpack.c.l.b16 %v838
        %v875 = vunpack.c.l.b16 %v839
        %v876 = vunpack.c.l.b16 %v840
        %v877 = vunpack.c.l.b16 %v841
        %v878 = vunpack.c.l.b16 %v842
        %v879 = vunpack.c.l.b16 %v843
        %v880 = vunpack.c.l.b16 %v844
        %v881 = vunpack.c.l.b16 %v845
        %v882 = vunpack.c.l.b16 %v846
        %v883 = vunpack.c.l.b16 %v847
        %v884 = vunpack.c.l.b16 %v848
        %v885 = vunpack.c.l.b16 %v849
        %v886 = vunpack.c.l.b16 %v850
        %v887 = vpack.c.b16 %v872, %v871
        %v888 = vpack.c.b16 %v874, %v873
        %v889 = vpack.c.b16 %v876, %v875
        %v890 = vpack.c.b16 %v878, %v877
        %v891 = vpack.c.b16 %v880, %v879
        %v892 = vpack.c.b16 %v882, %v881
        %v893 = vpack.c.b16 %v884, %v883
        %v894 = vpack.c.b16 %v886, %v885
        %903 = vmatprep.subr.bf16.mxu0 0
        %904 = vmatpush1.bf16.msra.mxu0 %v887
        %905 = vmatprep.subr.bf16.mxu0 0
        %906 = vmatpush1.bf16.msra.mxu0 %v888
        %907 = vmatprep.subr.bf16.mxu0 0
        %908 = vmatpush1.bf16.msra.mxu0 %v889
        %909 = vmatprep.subr.bf16.mxu0 0
        %910 = vmatpush1.bf16.msra.mxu0 %v890
        %911 = vmatprep.subr.bf16.mxu0 0
        %912 = vmatpush1.bf16.msra.mxu0 %v891
        %913 = vmatprep.subr.bf16.mxu0 0
        %914 = vmatpush1.bf16.msra.mxu0 %v892
        %915 = vmatprep.subr.bf16.mxu0 0
        %916 = vmatpush1.bf16.msra.mxu0 %v893
        %917 = vmatprep.subr.bf16.mxu0 0
        %918 = vmatpush1.bf16.msra.mxu0 %v894
        %919 = vmatprep.subr.bf16.mxu0 0
        %920 = vmatpush1.bf16.msra.mxu0 0
        %921 = vmatprep.subr.bf16.mxu0 0
        %922 = vmatpush1.bf16.msra.mxu0 0
        %923 = vmatprep.subr.bf16.mxu0 0
        %924 = vmatpush1.bf16.msra.mxu0 0
        %925 = vmatprep.subr.bf16.mxu0 0
        %926 = vmatpush1.bf16.msra.mxu0 0
        %927 = vmatprep.subr.bf16.mxu0 0
        %928 = vmatpush1.bf16.msra.mxu0 0
        %929 = vmatprep.subr.bf16.mxu0 0
        %930 = vmatpush1.bf16.msra.mxu0 0
        %931 = vmatprep.subr.bf16.mxu0 0
        %932 = vmatpush1.bf16.msra.mxu0 0
        %933 = vmatprep.subr.bf16.mxu0 0
        %934 = vmatpush1.bf16.msra.mxu0 0
        %935 = vmatprep.mubr.bf16.mxu0 0
        %936 = vmatmul.mubr.bf16.gmra.mrb[0].mxu0 %v818
        %v937 = vpop.f32.mrb[0].mxu0
        %v938 = vadd.f32 %v854, %v937
        %v939 = vpop.f32.mrb[0].mxu0
        %v940 = vpop.f32.mrb[0].mxu0
        %v941 = vadd.f32 %v854, %v940
        %v942 = vpop.f32.mrb[0].mxu0
        %943 = vmatprep.mubr.bf16.mxu0 0
        %944 = vmatmul.mubr.bf16.gmra.mrb[0].mxu0 %v819
        %v945 = vpop.f32.mrb[0].mxu0
        %v946 = vadd.f32 %v854, %v945
        %v947 = vpop.f32.mrb[0].mxu0
        %v948 = vpop.f32.mrb[0].mxu0
        %v949 = vadd.f32 %v854, %v948
        %v950 = vpop.f32.mrb[0].mxu0
        %951 = vmatprep.mubr.bf16.mxu0 0
        %952 = vmatmul.mubr.bf16.gmra.mrb[0].mxu0 %v820
        %v953 = vpop.f32.mrb[0].mxu0
        %v954 = vadd.f32 %v854, %v953
        %v955 = vpop.f32.mrb[0].mxu0
        %v956 = vpop.f32.mrb[0].mxu0
        %v957 = vadd.f32 %v854, %v956
        %v958 = vpop.f32.mrb[0].mxu0
        %959 = vmatprep.mubr.bf16.mxu0 0
        %960 = vmatmul.mubr.bf16.gmra.mrb[0].mxu0 %v821
        %v961 = vpop.f32.mrb[0].mxu0
        %v962 = vadd.f32 %v854, %v961
        %v963 = vpop.f32.mrb[0].mxu0
        %v964 = vpop.f32.mrb[0].mxu0
        %v965 = vadd.f32 %v854, %v964
        %v966 = vpop.f32.mrb[0].mxu0
        %967 = vmatprep.mubr.bf16.mxu0 0
        %968 = vmatmul.mubr.bf16.gmra.mrb[0].mxu0 %v822
        %v969 = vpop.f32.mrb[0].mxu0
        %v970 = vadd.f32 %v854, %v969
        %v971 = vpop.f32.mrb[0].mxu0
        %v972 = vpop.f32.mrb[0].mxu0
        %v973 = vadd.f32 %v854, %v972
        %v974 = vpop.f32.mrb[0].mxu0
        %975 = vmatprep.mubr.bf16.mxu0 0
        %976 = vmatmul.mubr.bf16.gmra.mrb[0].mxu0 %v823
        %v977 = vpop.f32.mrb[0].mxu0
        %v978 = vadd.f32 %v854, %v977
        %v979 = vpop.f32.mrb[0].mxu0
        %v980 = vpop.f32.mrb[0].mxu0
        %v981 = vadd.f32 %v854, %v980
        %v982 = vpop.f32.mrb[0].mxu0
        %983 = vmatprep.mubr.bf16.mxu0 0
        %984 = vmatmul.mubr.bf16.gmra.mrb[0].mxu0 %v824
        %v985 = vpop.f32.mrb[0].mxu0
        %v986 = vadd.f32 %v854, %v985
        %v987 = vpop.f32.mrb[0].mxu0
        %v988 = vpop.f32.mrb[0].mxu0
        %v989 = vadd.f32 %v854, %v988
        %v990 = vpop.f32.mrb[0].mxu0
        %991 = vmatprep.mubr.bf16.mxu0 0
        %992 = vmatmul.mubr.bf16.gmra.mrb[0].mxu0 %v825
        %v993 = vpop.f32.mrb[0].mxu0
        %v994 = vadd.f32 %v854, %v993
        %v995 = vpop.f32.mrb[0].mxu0
        %v996 = vpop.f32.mrb[0].mxu0
        %v997 = vadd.f32 %v854, %v996
        %v998 = vpop.f32.mrb[0].mxu0
        %999 = vmatprep.mubr.bf16.mxu0 0
        %1000 = vmatmul.mubr.bf16.gmra.mrb[0].mxu0 %v826
        %v1001 = vpop.f32.mrb[0].mxu0
        %v1002 = vadd.f32 %v854, %v1001
        %v1003 = vpop.f32.mrb[0].mxu0
        %v1004 = vpop.f32.mrb[0].mxu0
        %v1005 = vadd.f32 %v854, %v1004
        %v1006 = vpop.f32.mrb[0].mxu0
        %1007 = vmatprep.mubr.bf16.mxu0 0
        %1008 = vmatmul.mubr.bf16.gmra.mrb[0].mxu0 %v827
        %v1009 = vpop.f32.mrb[0].mxu0
        %v1010 = vadd.f32 %v854, %v1009
        %v1011 = vpop.f32.mrb[0].mxu0
        %v1012 = vpop.f32.mrb[0].mxu0
        %v1013 = vadd.f32 %v854, %v1012
        %v1014 = vpop.f32.mrb[0].mxu0
        %1015 = vmatprep.mubr.bf16.mxu0 0
        %1016 = vmatmul.mubr.bf16.gmra.mrb[0].mxu0 %v828
        %v1017 = vpop.f32.mrb[0].mxu0
        %v1018 = vadd.f32 %v854, %v1017
        %v1019 = vpop.f32.mrb[0].mxu0
        %v1020 = vpop.f32.mrb[0].mxu0
        %v1021 = vadd.f32 %v854, %v1020
        %v1022 = vpop.f32.mrb[0].mxu0
        %1023 = vmatprep.mubr.bf16.mxu0 0
        %1024 = vmatmul.mubr.bf16.gmra.mrb[0].mxu0 %v829
        %v1025 = vpop.f32.mrb[0].mxu0
        %v1026 = vadd.f32 %v854, %v1025
        %v1027 = vpop.f32.mrb[0].mxu0
        %v1028 = vpop.f32.mrb[0].mxu0
        %v1029 = vadd.f32 %v854, %v1028
        %v1030 = vpop.f32.mrb[0].mxu0
        %1031 = vmatprep.mubr.bf16.mxu0 0
        %1032 = vmatmul.mubr.bf16.gmra.mrb[0].mxu0 %v830
        %v1033 = vpop.f32.mrb[0].mxu0
        %v1034 = vadd.f32 %v854, %v1033
        %v1035 = vpop.f32.mrb[0].mxu0
        %v1036 = vpop.f32.mrb[0].mxu0
        %v1037 = vadd.f32 %v854, %v1036
        %v1038 = vpop.f32.mrb[0].mxu0
        %1039 = vmatprep.mubr.bf16.mxu0 0
        %1040 = vmatmul.mubr.bf16.gmra.mrb[0].mxu0 %v831
        %v1041 = vpop.f32.mrb[0].mxu0
        %v1042 = vadd.f32 %v854, %v1041
        %v1043 = vpop.f32.mrb[0].mxu0
        %v1044 = vpop.f32.mrb[0].mxu0
        %v1045 = vadd.f32 %v854, %v1044
        %v1046 = vpop.f32.mrb[0].mxu0
        %1047 = vmatprep.mubr.bf16.mxu0 0
        %1048 = vmatmul.mubr.bf16.gmra.mrb[0].mxu0 %v832
        %v1049 = vpop.f32.mrb[0].mxu0
        %v1050 = vadd.f32 %v854, %v1049
        %v1051 = vpop.f32.mrb[0].mxu0
        %v1052 = vpop.f32.mrb[0].mxu0
        %v1053 = vadd.f32 %v854, %v1052
        %v1054 = vpop.f32.mrb[0].mxu0
        %1055 = vmatprep.mubr.bf16.mxu0 0
        %1056 = vmatmul.mubr.bf16.gmra.mrb[0].mxu0 %v833
        %v1057 = vpop.f32.mrb[0].mxu0
        %v1058 = vadd.f32 %v854, %v1057
        %v1059 = vpop.f32.mrb[0].mxu0
        %v1060 = vpop.f32.mrb[0].mxu0
        %v1061 = vadd.f32 %v854, %v1060
        %v1062 = vpop.f32.mrb[0].mxu0
        %1063 = vdwg.mxu0
        %v1064 = vadd.f32 %v938, 3.0
        %v1065 = vadd.f32 %v941, 3.0
        %v1066 = vadd.f32 %v946, 3.0
        %v1067 = vadd.f32 %v949, 3.0
        %v1068 = vadd.f32 %v954, 3.0
        %v1069 = vadd.f32 %v957, 3.0
        %v1070 = vadd.f32 %v962, 3.0
        %v1071 = vadd.f32 %v965, 3.0
        %v1072 = vadd.f32 %v970, 3.0
        %v1073 = vadd.f32 %v973, 3.0
        %v1074 = vadd.f32 %v978, 3.0
        %v1075 = vadd.f32 %v981, 3.0
        %v1076 = vadd.f32 %v986, 3.0
        %v1077 = vadd.f32 %v989, 3.0
        %v1078 = vadd.f32 %v994, 3.0
        %v1079 = vadd.f32 %v997, 3.0
        %v1080 = vadd.f32 %v1002, 3.0
        %v1081 = vadd.f32 %v1005, 3.0
        %v1082 = vadd.f32 %v1010, 3.0
        %v1083 = vadd.f32 %v1013, 3.0
        %v1084 = vadd.f32 %v1018, 3.0
        %v1085 = vadd.f32 %v1021, 3.0
        %v1086 = vadd.f32 %v1026, 3.0
        %v1087 = vadd.f32 %v1029, 3.0
        %v1088 = vadd.f32 %v1034, 3.0
        %v1089 = vadd.f32 %v1037, 3.0
        %v1090 = vadd.f32 %v1042, 3.0
        %v1091 = vadd.f32 %v1045, 3.0
        %v1092 = vadd.f32 %v1050, 3.0
        %v1093 = vadd.f32 %v1053, 3.0
        %v1094 = vadd.f32 %v1058, 3.0
        %v1095 = vadd.f32 %v1061, 3.0
        %v1096 = vmax.f32 %v1064, 0.0
        %v1097 = vmax.f32 %v1065, 0.0
        %v1098 = vmax.f32 %v1066, 0.0
        %v1099 = vmax.f32 %v1067, 0.0
        %v1100 = vmax.f32 %v1068, 0.0
        %v1101 = vmax.f32 %v1069, 0.0
        %v1102 = vmax.f32 %v1070, 0.0
        %v1103 = vmax.f32 %v1071, 0.0
        %v1104 = vmax.f32 %v1072, 0.0
        %v1105 = vmax.f32 %v1073, 0.0
        %v1106 = vmax.f32 %v1074, 0.0
        %v1107 = vmax.f32 %v1075, 0.0
        %v1108 = vmax.f32 %v1076, 0.0
        %v1109 = vmax.f32 %v1077, 0.0
        %v1110 = vmax.f32 %v1078, 0.0
        %v1111 = vmax.f32 %v1079, 0.0
        %v1112 = vmax.f32 %v1080, 0.0
        %v1113 = vmax.f32 %v1081, 0.0
        %v1114 = vmax.f32 %v1082, 0.0
        %v1115 = vmax.f32 %v1083, 0.0
        %v1116 = vmax.f32 %v1084, 0.0
        %v1117 = vmax.f32 %v1085, 0.0
        %v1118 = vmax.f32 %v1086, 0.0
        %v1119 = vmax.f32 %v1087, 0.0
        %v1120 = vmax.f32 %v1088, 0.0
        %v1121 = vmax.f32 %v1089, 0.0
        %v1122 = vmax.f32 %v1090, 0.0
        %v1123 = vmax.f32 %v1091, 0.0
        %v1124 = vmax.f32 %v1092, 0.0
        %v1125 = vmax.f32 %v1093, 0.0
        %v1126 = vmax.f32 %v1094, 0.0
        %v1127 = vmax.f32 %v1095, 0.0
        %v1128 = vmin.f32 %v1096, 6.0
        %v1129 = vmin.f32 %v1097, 6.0
        %v1130 = vmin.f32 %v1098, 6.0
        %v1131 = vmin.f32 %v1099, 6.0
        %v1132 = vmin.f32 %v1100, 6.0
        %v1133 = vmin.f32 %v1101, 6.0
        %v1134 = vmin.f32 %v1102, 6.0
        %v1135 = vmin.f32 %v1103, 6.0
        %v1136 = vmin.f32 %v1104, 6.0
        %v1137 = vmin.f32 %v1105, 6.0
        %v1138 = vmin.f32 %v1106, 6.0
        %v1139 = vmin.f32 %v1107, 6.0
        %v1140 = vmin.f32 %v1108, 6.0
        %v1141 = vmin.f32 %v1109, 6.0
        %v1142 = vmin.f32 %v1110, 6.0
        %v1143 = vmin.f32 %v1111, 6.0
        %v1144 = vmin.f32 %v1112, 6.0
        %v1145 = vmin.f32 %v1113, 6.0
        %v1146 = vmin.f32 %v1114, 6.0
        %v1147 = vmin.f32 %v1115, 6.0
        %v1148 = vmin.f32 %v1116, 6.0
        %v1149 = vmin.f32 %v1117, 6.0
        %v1150 = vmin.f32 %v1118, 6.0
        %v1151 = vmin.f32 %v1119, 6.0
        %v1152 = vmin.f32 %v1120, 6.0
        %v1153 = vmin.f32 %v1121, 6.0
        %v1154 = vmin.f32 %v1122, 6.0
        %v1155 = vmin.f32 %v1123, 6.0
        %v1156 = vmin.f32 %v1124, 6.0
        %v1157 = vmin.f32 %v1125, 6.0
        %v1158 = vmin.f32 %v1126, 6.0
        %v1159 = vmin.f32 %v1127, 6.0
        %v1160 = vmul.f32 %v938, %v1128
        %v1161 = vmul.f32 %v941, %v1129
        %v1162 = vmul.f32 %v946, %v1130
        %v1163 = vmul.f32 %v949, %v1131
        %v1164 = vmul.f32 %v954, %v1132
        %v1165 = vmul.f32 %v957, %v1133
        %v1166 = vmul.f32 %v962, %v1134
        %v1167 = vmul.f32 %v965, %v1135
        %v1168 = vmul.f32 %v970, %v1136
        %v1169 = vmul.f32 %v973, %v1137
        %v1170 = vmul.f32 %v978, %v1138
        %v1171 = vmul.f32 %v981, %v1139
        %v1172 = vmul.f32 %v986, %v1140
        %v1173 = vmul.f32 %v989, %v1141
        %v1174 = vmul.f32 %v994, %v1142
        %v1175 = vmul.f32 %v997, %v1143
        %v1176 = vmul.f32 %v1002, %v1144
        %v1177 = vmul.f32 %v1005, %v1145
        %v1178 = vmul.f32 %v1010, %v1146
        %v1179 = vmul.f32 %v1013, %v1147
        %v1180 = vmul.f32 %v1018, %v1148
        %v1181 = vmul.f32 %v1021, %v1149
        %v1182 = vmul.f32 %v1026, %v1150
        %v1183 = vmul.f32 %v1029, %v1151
        %v1184 = vmul.f32 %v1034, %v1152
        %v1185 = vmul.f32 %v1037, %v1153
        %v1186 = vmul.f32 %v1042, %v1154
        %v1187 = vmul.f32 %v1045, %v1155
        %v1188 = vmul.f32 %v1050, %v1156
        %v1189 = vmul.f32 %v1053, %v1157
        %v1190 = vmul.f32 %v1058, %v1158
        %v1191 = vmul.f32 %v1061, %v1159
        %v1192 = vpack.c.bf16 %v1161, %v1160
        %v1193 = vpack.c.bf16 %v1163, %v1162
        %v1194 = vpack.c.bf16 %v1165, %v1164
        %v1195 = vpack.c.bf16 %v1167, %v1166
        %v1196 = vpack.c.bf16 %v1169, %v1168
        %v1197 = vpack.c.bf16 %v1171, %v1170
        %v1198 = vpack.c.bf16 %v1173, %v1172
        %v1199 = vpack.c.bf16 %v1175, %v1174
        %v1200 = vpack.c.bf16 %v1177, %v1176
        %v1201 = vpack.c.bf16 %v1179, %v1178
        %v1202 = vpack.c.bf16 %v1181, %v1180
        %v1203 = vpack.c.bf16 %v1183, %v1182
        %v1204 = vpack.c.bf16 %v1185, %v1184
        %v1205 = vpack.c.bf16 %v1187, %v1186
        %v1206 = vpack.c.bf16 %v1189, %v1188
        %v1207 = vpack.c.bf16 %v1191, %v1190
        %s1208 = scalar_lea.vmem %s1, 192
        %v1209 = vld [vmem:[%s1208] sm:$0xf]
        %v1210 = vld [vmem:[%s1208 + $0x4] sm:$0xf]
        %v1211 = vld [vmem:[%s1208 + $0x8] sm:$0xf]
        %v1212 = vld [vmem:[%s1208 + $0xc] sm:$0xf]
        %v1213 = vld [vmem:[%s1208 + $0x10] sm:$0xf]
        %v1214 = vld [vmem:[%s1208 + $0x14] sm:$0xf]
        %v1215 = vld [vmem:[%s1208 + $0x18] sm:$0xf]
        %v1216 = vld [vmem:[%s1208 + $0x1c] sm:$0xf]
        %v1217 = vld [vmem:[%s1208 + $0x20] sm:$0xf]
        %v1218 = vld [vmem:[%s1208 + $0x24] sm:$0xf]
        %v1219 = vld [vmem:[%s1208 + $0x28] sm:$0xf]
        %v1220 = vld [vmem:[%s1208 + $0x2c] sm:$0xf]
        %v1221 = vld [vmem:[%s1208 + $0x30] sm:$0xf]
        %v1222 = vld [vmem:[%s1208 + $0x34] sm:$0xf]
        %v1223 = vld [vmem:[%s1208 + $0x38] sm:$0xf]
        %v1224 = vld [vmem:[%s1208 + $0x3c] sm:$0xf]
        %v1225 = vlaneseq
        %v1226 = vshrl.u32 %v1225, 7
        %v1227 = vsub.s32 3, %v1226
        %v1228 = vrot.slane %v205, %v1227
        %v1245 = vunpack.c.l.b16 %v1209
        %v1246 = vunpack.c.l.b16 %v1210
        %v1247 = vunpack.c.l.b16 %v1211
        %v1248 = vunpack.c.l.b16 %v1212
        %v1249 = vunpack.c.l.b16 %v1213
        %v1250 = vunpack.c.l.b16 %v1214
        %v1251 = vunpack.c.l.b16 %v1215
        %v1252 = vunpack.c.l.b16 %v1216
        %v1253 = vunpack.c.l.b16 %v1217
        %v1254 = vunpack.c.l.b16 %v1218
        %v1255 = vunpack.c.l.b16 %v1219
        %v1256 = vunpack.c.l.b16 %v1220
        %v1257 = vunpack.c.l.b16 %v1221
        %v1258 = vunpack.c.l.b16 %v1222
        %v1259 = vunpack.c.l.b16 %v1223
        %v1260 = vunpack.c.l.b16 %v1224
        %v1261 = vpack.c.b16 %v1246, %v1245
        %v1262 = vpack.c.b16 %v1248, %v1247
        %v1263 = vpack.c.b16 %v1250, %v1249
        %v1264 = vpack.c.b16 %v1252, %v1251
        %v1265 = vpack.c.b16 %v1254, %v1253
        %v1266 = vpack.c.b16 %v1256, %v1255
        %v1267 = vpack.c.b16 %v1258, %v1257
        %v1268 = vpack.c.b16 %v1260, %v1259
        %1277 = vmatprep.subr.bf16.mxu0 0
        %1278 = vmatpush1.bf16.msra.mxu0 %v1261
        %1279 = vmatprep.subr.bf16.mxu0 0
        %1280 = vmatpush1.bf16.msra.mxu0 %v1262
        %1281 = vmatprep.subr.bf16.mxu0 0
        %1282 = vmatpush1.bf16.msra.mxu0 %v1263
        %1283 = vmatprep.subr.bf16.mxu0 0
        %1284 = vmatpush1.bf16.msra.mxu0 %v1264
        %1285 = vmatprep.subr.bf16.mxu0 0
        %1286 = vmatpush1.bf16.msra.mxu0 %v1265
        %1287 = vmatprep.subr.bf16.mxu0 0
        %1288 = vmatpush1.bf16.msra.mxu0 %v1266
        %1289 = vmatprep.subr.bf16.mxu0 0
        %1290 = vmatpush1.bf16.msra.mxu0 %v1267
        %1291 = vmatprep.subr.bf16.mxu0 0
        %1292 = vmatpush1.bf16.msra.mxu0 %v1268
        %1293 = vmatprep.subr.bf16.mxu0 0
        %1294 = vmatpush1.bf16.msra.mxu0 0
        %1295 = vmatprep.subr.bf16.mxu0 0
        %1296 = vmatpush1.bf16.msra.mxu0 0
        %1297 = vmatprep.subr.bf16.mxu0 0
        %1298 = vmatpush1.bf16.msra.mxu0 0
        %1299 = vmatprep.subr.bf16.mxu0 0
        %1300 = vmatpush1.bf16.msra.mxu0 0
        %1301 = vmatprep.subr.bf16.mxu0 0
        %1302 = vmatpush1.bf16.msra.mxu0 0
        %1303 = vmatprep.subr.bf16.mxu0 0
        %1304 = vmatpush1.bf16.msra.mxu0 0
        %1305 = vmatprep.subr.bf16.mxu0 0
        %1306 = vmatpush1.bf16.msra.mxu0 0
        %1307 = vmatprep.subr.bf16.mxu0 0
        %1308 = vmatpush1.bf16.msra.mxu0 0
        %1309 = vmatprep.mubr.bf16.mxu0 0
        %1310 = vmatmul.mubr.bf16.gmra.mrb[0].mxu0 %v1192
        %v1311 = vpop.f32.mrb[0].mxu0
        %v1312 = vadd.f32 %v1228, %v1311
        %v1313 = vpop.f32.mrb[0].mxu0
        %v1314 = vpop.f32.mrb[0].mxu0
        %v1315 = vadd.f32 %v1228, %v1314
        %v1316 = vpop.f32.mrb[0].mxu0
        %1317 = vmatprep.mubr.bf16.mxu0 0
        %1318 = vmatmul.mubr.bf16.gmra.mrb[0].mxu0 %v1193
        %v1319 = vpop.f32.mrb[0].mxu0
        %v1320 = vadd.f32 %v1228, %v1319
        %v1321 = vpop.f32.mrb[0].mxu0
        %v1322 = vpop.f32.mrb[0].mxu0
        %v1323 = vadd.f32 %v1228, %v1322
        %v1324 = vpop.f32.mrb[0].mxu0
        %1325 = vmatprep.mubr.bf16.mxu0 0
        %1326 = vmatmul.mubr.bf16.gmra.mrb[0].mxu0 %v1194
        %v1327 = vpop.f32.mrb[0].mxu0
        %v1328 = vadd.f32 %v1228, %v1327
        %v1329 = vpop.f32.mrb[0].mxu0
        %v1330 = vpop.f32.mrb[0].mxu0
        %v1331 = vadd.f32 %v1228, %v1330
        %v1332 = vpop.f32.mrb[0].mxu0
        %1333 = vmatprep.mubr.bf16.mxu0 0
        %1334 = vmatmul.mubr.bf16.gmra.mrb[0].mxu0 %v1195
        %v1335 = vpop.f32.mrb[0].mxu0
        %v1336 = vadd.f32 %v1228, %v1335
        %v1337 = vpop.f32.mrb[0].mxu0
        %v1338 = vpop.f32.mrb[0].mxu0
        %v1339 = vadd.f32 %v1228, %v1338
        %v1340 = vpop.f32.mrb[0].mxu0
        %1341 = vmatprep.mubr.bf16.mxu0 0
        %1342 = vmatmul.mubr.bf16.gmra.mrb[0].mxu0 %v1196
        %v1343 = vpop.f32.mrb[0].mxu0
        %v1344 = vadd.f32 %v1228, %v1343
        %v1345 = vpop.f32.mrb[0].mxu0
        %v1346 = vpop.f32.mrb[0].mxu0
        %v1347 = vadd.f32 %v1228, %v1346
        %v1348 = vpop.f32.mrb[0].mxu0
        %1349 = vmatprep.mubr.bf16.mxu0 0
        %1350 = vmatmul.mubr.bf16.gmra.mrb[0].mxu0 %v1197
        %v1351 = vpop.f32.mrb[0].mxu0
        %v1352 = vadd.f32 %v1228, %v1351
        %v1353 = vpop.f32.mrb[0].mxu0
        %v1354 = vpop.f32.mrb[0].mxu0
        %v1355 = vadd.f32 %v1228, %v1354
        %v1356 = vpop.f32.mrb[0].mxu0
        %1357 = vmatprep.mubr.bf16.mxu0 0
        %1358 = vmatmul.mubr.bf16.gmra.mrb[0].mxu0 %v1198
        %v1359 = vpop.f32.mrb[0].mxu0
        %v1360 = vadd.f32 %v1228, %v1359
        %v1361 = vpop.f32.mrb[0].mxu0
        %v1362 = vpop.f32.mrb[0].mxu0
        %v1363 = vadd.f32 %v1228, %v1362
        %v1364 = vpop.f32.mrb[0].mxu0
        %1365 = vmatprep.mubr.bf16.mxu0 0
        %1366 = vmatmul.mubr.bf16.gmra.mrb[0].mxu0 %v1199
        %v1367 = vpop.f32.mrb[0].mxu0
        %v1368 = vadd.f32 %v1228, %v1367
        %v1369 = vpop.f32.mrb[0].mxu0
        %v1370 = vpop.f32.mrb[0].mxu0
        %v1371 = vadd.f32 %v1228, %v1370
        %v1372 = vpop.f32.mrb[0].mxu0
        %1373 = vmatprep.mubr.bf16.mxu0 0
        %1374 = vmatmul.mubr.bf16.gmra.mrb[0].mxu0 %v1200
        %v1375 = vpop.f32.mrb[0].mxu0
        %v1376 = vadd.f32 %v1228, %v1375
        %v1377 = vpop.f32.mrb[0].mxu0
        %v1378 = vpop.f32.mrb[0].mxu0
        %v1379 = vadd.f32 %v1228, %v1378
        %v1380 = vpop.f32.mrb[0].mxu0
        %1381 = vmatprep.mubr.bf16.mxu0 0
        %1382 = vmatmul.mubr.bf16.gmra.mrb[0].mxu0 %v1201
        %v1383 = vpop.f32.mrb[0].mxu0
        %v1384 = vadd.f32 %v1228, %v1383
        %v1385 = vpop.f32.mrb[0].mxu0
        %v1386 = vpop.f32.mrb[0].mxu0
        %v1387 = vadd.f32 %v1228, %v1386
        %v1388 = vpop.f32.mrb[0].mxu0
        %1389 = vmatprep.mubr.bf16.mxu0 0
        %1390 = vmatmul.mubr.bf16.gmra.mrb[0].mxu0 %v1202
        %v1391 = vpop.f32.mrb[0].mxu0
        %v1392 = vadd.f32 %v1228, %v1391
        %v1393 = vpop.f32.mrb[0].mxu0
        %v1394 = vpop.f32.mrb[0].mxu0
        %v1395 = vadd.f32 %v1228, %v1394
        %v1396 = vpop.f32.mrb[0].mxu0
        %1397 = vmatprep.mubr.bf16.mxu0 0
        %1398 = vmatmul.mubr.bf16.gmra.mrb[0].mxu0 %v1203
        %v1399 = vpop.f32.mrb[0].mxu0
        %v1400 = vadd.f32 %v1228, %v1399
        %v1401 = vpop.f32.mrb[0].mxu0
        %v1402 = vpop.f32.mrb[0].mxu0
        %v1403 = vadd.f32 %v1228, %v1402
        %v1404 = vpop.f32.mrb[0].mxu0
        %1405 = vmatprep.mubr.bf16.mxu0 0
        %1406 = vmatmul.mubr.bf16.gmra.mrb[0].mxu0 %v1204
        %v1407 = vpop.f32.mrb[0].mxu0
        %v1408 = vadd.f32 %v1228, %v1407
        %v1409 = vpop.f32.mrb[0].mxu0
        %v1410 = vpop.f32.mrb[0].mxu0
        %v1411 = vadd.f32 %v1228, %v1410
        %v1412 = vpop.f32.mrb[0].mxu0
        %1413 = vmatprep.mubr.bf16.mxu0 0
        %1414 = vmatmul.mubr.bf16.gmra.mrb[0].mxu0 %v1205
        %v1415 = vpop.f32.mrb[0].mxu0
        %v1416 = vadd.f32 %v1228, %v1415
        %v1417 = vpop.f32.mrb[0].mxu0
        %v1418 = vpop.f32.mrb[0].mxu0
        %v1419 = vadd.f32 %v1228, %v1418
        %v1420 = vpop.f32.mrb[0].mxu0
        %1421 = vmatprep.mubr.bf16.mxu0 0
        %1422 = vmatmul.mubr.bf16.gmra.mrb[0].mxu0 %v1206
        %v1423 = vpop.f32.mrb[0].mxu0
        %v1424 = vadd.f32 %v1228, %v1423
        %v1425 = vpop.f32.mrb[0].mxu0
        %v1426 = vpop.f32.mrb[0].mxu0
        %v1427 = vadd.f32 %v1228, %v1426
        %v1428 = vpop.f32.mrb[0].mxu0
        %1429 = vmatprep.mubr.bf16.mxu0 0
        %1430 = vmatmul.mubr.bf16.gmra.mrb[0].mxu0 %v1207
        %v1431 = vpop.f32.mrb[0].mxu0
        %v1432 = vadd.f32 %v1228, %v1431
        %v1433 = vpop.f32.mrb[0].mxu0
        %v1434 = vpop.f32.mrb[0].mxu0
        %v1435 = vadd.f32 %v1228, %v1434
        %v1436 = vpop.f32.mrb[0].mxu0
        %1437 = vdwg.mxu0
        %v1438 = vtanh.pop %v1312
        %v1439 = vtanh.pop %v1315
        %v1440 = vtanh.pop %v1320
        %v1441 = vtanh.pop %v1323
        %v1442 = vtanh.pop %v1328
        %v1443 = vtanh.pop %v1331
        %v1444 = vtanh.pop %v1336
        %v1445 = vtanh.pop %v1339
        %v1446 = vtanh.pop %v1344
        %v1447 = vtanh.pop %v1347
        %v1448 = vtanh.pop %v1352
        %v1449 = vtanh.pop %v1355
        %v1450 = vtanh.pop %v1360
        %v1451 = vtanh.pop %v1363
        %v1452 = vtanh.pop %v1368
        %v1453 = vtanh.pop %v1371
        %v1454 = vtanh.pop %v1376
        %v1455 = vtanh.pop %v1379
        %v1456 = vtanh.pop %v1384
        %v1457 = vtanh.pop %v1387
        %v1458 = vtanh.pop %v1392
        %v1459 = vtanh.pop %v1395
        %v1460 = vtanh.pop %v1400
        %v1461 = vtanh.pop %v1403
        %v1462 = vtanh.pop %v1408
        %v1463 = vtanh.pop %v1411
        %v1464 = vtanh.pop %v1416
        %v1465 = vtanh.pop %v1419
        %v1466 = vtanh.pop %v1424
        %v1467 = vtanh.pop %v1427
        %v1468 = vtanh.pop %v1432
        %v1469 = vtanh.pop %v1435
        %v1470 = vpack.c.bf16 %v1439, %v1438
        %v1471 = vpack.c.bf16 %v1441, %v1440
        %v1472 = vpack.c.bf16 %v1443, %v1442
        %v1473 = vpack.c.bf16 %v1445, %v1444
        %v1474 = vpack.c.bf16 %v1447, %v1446
        %v1475 = vpack.c.bf16 %v1449, %v1448
        %v1476 = vpack.c.bf16 %v1451, %v1450
        %v1477 = vpack.c.bf16 %v1453, %v1452
        %v1478 = vpack.c.bf16 %v1455, %v1454
        %v1479 = vpack.c.bf16 %v1457, %v1456
        %v1480 = vpack.c.bf16 %v1459, %v1458
        %v1481 = vpack.c.bf16 %v1461, %v1460
        %v1482 = vpack.c.bf16 %v1463, %v1462
        %v1483 = vpack.c.bf16 %v1465, %v1464
        %v1484 = vpack.c.bf16 %v1467, %v1466
        %v1485 = vpack.c.bf16 %v1469, %v1468
        %v1502 = vunpack.c.l.b16 %v1470
        %v1503 = vunpack.c.h.b16 %v1470
        %v1504 = vunpack.c.l.b16 %v1471
        %v1505 = vunpack.c.h.b16 %v1471
        %v1506 = vunpack.c.l.b16 %v1472
        %v1507 = vunpack.c.h.b16 %v1472
        %v1508 = vunpack.c.l.b16 %v1473
        %v1509 = vunpack.c.h.b16 %v1473
        %v1510 = vunpack.c.l.b16 %v1474
        %v1511 = vunpack.c.h.b16 %v1474
        %v1512 = vunpack.c.l.b16 %v1475
        %v1513 = vunpack.c.h.b16 %v1475
        %v1514 = vunpack.c.l.b16 %v1476
        %v1515 = vunpack.c.h.b16 %v1476
        %v1516 = vunpack.c.l.b16 %v1477
        %v1517 = vunpack.c.h.b16 %v1477
        %v1518 = vunpack.c.l.b16 %v1478
        %v1519 = vunpack.c.h.b16 %v1478
        %v1520 = vunpack.c.l.b16 %v1479
        %v1521 = vunpack.c.h.b16 %v1479
        %v1522 = vunpack.c.l.b16 %v1480
        %v1523 = vunpack.c.h.b16 %v1480
        %v1524 = vunpack.c.l.b16 %v1481
        %v1525 = vunpack.c.h.b16 %v1481
        %v1526 = vunpack.c.l.b16 %v1482
        %v1527 = vunpack.c.h.b16 %v1482
        %v1528 = vunpack.c.l.b16 %v1483
        %v1529 = vunpack.c.h.b16 %v1483
        %v1530 = vunpack.c.l.b16 %v1484
        %v1531 = vunpack.c.h.b16 %v1484
        %v1532 = vunpack.c.l.b16 %v1485
        %v1533 = vunpack.c.h.b16 %v1485
        %v1534 = vpack.c.b16 %v1502, %v1502
        %v1535 = vpack.c.b16 %v1503, %v1503
        %v1536 = vpack.c.b16 %v1504, %v1504
        %v1537 = vpack.c.b16 %v1505, %v1505
        %v1538 = vpack.c.b16 %v1506, %v1506
        %v1539 = vpack.c.b16 %v1507, %v1507
        %v1540 = vpack.c.b16 %v1508, %v1508
        %v1541 = vpack.c.b16 %v1509, %v1509
        %v1542 = vpack.c.b16 %v1510, %v1510
        %v1543 = vpack.c.b16 %v1511, %v1511
        %v1544 = vpack.c.b16 %v1512, %v1512
        %v1545 = vpack.c.b16 %v1513, %v1513
        %v1546 = vpack.c.b16 %v1514, %v1514
        %v1547 = vpack.c.b16 %v1515, %v1515
        %v1548 = vpack.c.b16 %v1516, %v1516
        %v1549 = vpack.c.b16 %v1517, %v1517
        %v1550 = vpack.c.b16 %v1518, %v1518
        %v1551 = vpack.c.b16 %v1519, %v1519
        %v1552 = vpack.c.b16 %v1520, %v1520
        %v1553 = vpack.c.b16 %v1521, %v1521
        %v1554 = vpack.c.b16 %v1522, %v1522
        %v1555 = vpack.c.b16 %v1523, %v1523
        %v1556 = vpack.c.b16 %v1524, %v1524
        %v1557 = vpack.c.b16 %v1525, %v1525
        %v1558 = vpack.c.b16 %v1526, %v1526
        %v1559 = vpack.c.b16 %v1527, %v1527
        %v1560 = vpack.c.b16 %v1528, %v1528
        %v1561 = vpack.c.b16 %v1529, %v1529
        %v1562 = vpack.c.b16 %v1530, %v1530
        %v1563 = vpack.c.b16 %v1531, %v1531
        %v1564 = vpack.c.b16 %v1532, %v1532
        %v1565 = vpack.c.b16 %v1533, %v1533
        %1598 = vst [vmem:[%s164] sm:$0xf] %v1534
        %1599 = vst [vmem:[%s164 + $0x4] sm:$0xf] %v1535
        %1600 = vst [vmem:[%s164 + $0x8] sm:$0xf] %v1536
        %1601 = vst [vmem:[%s164 + $0xc] sm:$0xf] %v1537
        %1602 = vst [vmem:[%s164 + $0x10] sm:$0xf] %v1538
        %1603 = vst [vmem:[%s164 + $0x14] sm:$0xf] %v1539
        %1604 = vst [vmem:[%s164 + $0x18] sm:$0xf] %v1540
        %1605 = vst [vmem:[%s164 + $0x1c] sm:$0xf] %v1541
        %1606 = vst [vmem:[%s164 + $0x20] sm:$0xf] %v1542
        %1607 = vst [vmem:[%s164 + $0x24] sm:$0xf] %v1543
        %1608 = vst [vmem:[%s164 + $0x28] sm:$0xf] %v1544
        %1609 = vst [vmem:[%s164 + $0x2c] sm:$0xf] %v1545
        %1610 = vst [vmem:[%s164 + $0x30] sm:$0xf] %v1546
        %1611 = vst [vmem:[%s164 + $0x34] sm:$0xf] %v1547
        %1612 = vst [vmem:[%s164 + $0x38] sm:$0xf] %v1548
        %1613 = vst [vmem:[%s164 + $0x3c] sm:$0xf] %v1549
        %1614 = vst [vmem:[%s164 + $0x40] sm:$0xf] %v1550
        %1615 = vst [vmem:[%s164 + $0x44] sm:$0xf] %v1551
        %1616 = vst [vmem:[%s164 + $0x48] sm:$0xf] %v1552
        %1617 = vst [vmem:[%s164 + $0x4c] sm:$0xf] %v1553
        %1618 = vst [vmem:[%s164 + $0x50] sm:$0xf] %v1554
        %1619 = vst [vmem:[%s164 + $0x54] sm:$0xf] %v1555
        %1620 = vst [vmem:[%s164 + $0x58] sm:$0xf] %v1556
        %1621 = vst [vmem:[%s164 + $0x5c] sm:$0xf] %v1557
        %1622 = vst [vmem:[%s164 + $0x60] sm:$0xf] %v1558
        %1623 = vst [vmem:[%s164 + $0x64] sm:$0xf] %v1559
        %1624 = vst [vmem:[%s164 + $0x68] sm:$0xf] %v1560
        %1625 = vst [vmem:[%s164 + $0x6c] sm:$0xf] %v1561
        %1626 = vst [vmem:[%s164 + $0x70] sm:$0xf] %v1562
        %1627 = vst [vmem:[%s164 + $0x74] sm:$0xf] %v1563
        %1628 = vst [vmem:[%s164 + $0x78] sm:$0xf] %v1564
        %1629 = vst [vmem:[%s164 + $0x7c] sm:$0xf] %v1565
        %s1630 = sand.u32 %s93, 1
        %s1631 = scalar_lea.sflag [#allocation3], %s1630
        %s1632 = sand.u32 %s93, 1
        %s1633 = smul.addr %s1632, 128
        %s1634 = scalar_lea.vmem [#allocation2], %s1633
        // Predicated region
        $region33: #{tpu_custom_call.1} parent=31 // pred_check
          %p1635 = pneg %p103
        $region34: #{tpu_custom_call.1} parent=31 // pred_check_branch
          %1637 = sbr.rel (%p1635) target = $region36
        $region35: #{tpu_custom_call.1} parent=31 // pred_region
          %s1638 = smul.u32 32, %s17
          %s1640 = ssub.s32 2048, 2048
          %1641 = vsyncadd %s1631, %s1640
          %s1642 = smul.addr %s1638, 64
          %s1643 = scalar_lea.hbm %s3, %s1642
          %s1644 = sshll.u32 %s1634, 4
          %s1645 = int_to_ptr.vmem [resolvable:$true] %s1644
          %1650 = dma.vmem_to_hbm [thread:$0]  %s1645, 2048, %s1643, %s1631, 64, 64, 4
        $region36: #{tpu_custom_call.1} parent=31 // pred_fallthru
          _
      $region32: #{tpu_custom_call.1} parent=5 // pred_fallthru
        _
      %p1651 = scmp.le.s32.totalorder 2, %s12
      // Predicated region
      $region37: #{tpu_custom_call.1} parent=5 // pred_check
        %p1652 = pneg %p1651
      $region38: #{tpu_custom_call.1} parent=5 // pred_check_branch
        %1654 = sbr.rel (%p1652) target = $region40
      $region39: #{tpu_custom_call.1} parent=5 // pred_region
        %s1655 = ssub.s32 %s12, 2
        // Predicated region
        $region41: #{tpu_custom_call.1} parent=39 // pred_check
          %p1656 = pneg %p109
        $region42: #{tpu_custom_call.1} parent=39 // pred_check_branch
          %1658 = sbr.rel (%p1656) target = $region44
        $region43: #{tpu_custom_call.1} parent=39 // pred_region
          %s1659 = sand.u32 %s94, 1
          %s1660 = scalar_lea.sflag [#allocation3], %s1659
          %s1661 = sand.u32 %s94, 1
          %s1662 = smul.addr %s1661, 128
          %s1663 = scalar_lea.vmem [#allocation2], %s1662
          %1664 = dma.done %s1660, 2048
        $region44: #{tpu_custom_call.1} parent=39 // pred_fallthru
          _
      $region40: #{tpu_custom_call.1} parent=5 // pred_fallthru
        _
    $region6: #{tpu_custom_call.1} parent=1 // loop_footer
      %s16 = sadd.s32 1, %s12
    $region7: #{tpu_custom_call.1} parent=1 // loop_footer_branch
      %11 = sbr.rel target = $region3
    $region8: #{tpu_custom_call.1} parent=1 // loop_exit
      _
    %1665 = vsyncpa [#allocation3], 1
    %s1666 = scalar_lea.sflag [#allocation3], 1
    %1667 = vsyncpa %s1666, 1

</llo_original>
